<compile_context>
chip_gen: v6e
topology: v6e:2x2x1
jax: 0.10.0
libtpu: 0.0.40
codegen_flags: <defaults>
</compile_context>

<pallas_src>
import jax
import jax.numpy as jnp
from jax.experimental import pallas as pl
from jax.experimental.pallas import tpu as pltpu


# ---------------- model hyper-parameters (small, deterministic) -------------
VOCAB_SIZE = 64
EMBED_DIM = 32
HIDDEN_DIM = 32
N_LAYERS = 2          # kernel below is written for exactly 2 LSTM layers
DENSE_DIM = 64
BATCH = 2
SEQ_LEN = 8

B_TILE = 8            # sublane-full batch tile
HIGH = jax.lax.Precision.HIGHEST


# ----------------------------- Pallas kernel --------------------------------
def _classifier_kernel(xg_ref,       # (T, Bt, 4H)  precomposed layer-0 gate preacts
                       whh0_ref,     # (H, 4H)      layer-0 recurrent weights
                       wih1_ref,     # (H, 4H)      layer-1 input weights
                       whh1_ref,     # (H, 4H)      layer-1 recurrent weights
                       b1_ref,       # (1, 4H)
                       wd_ref,       # (H, 64)      dense
                       bd_ref,       # (1, 64)
                       wo_ref,       # (1, 64)      out head as a row vector
                       bo_ref,       # (1, 1)
                       out_ref):     # (Bt, 1)
    T, B, G = xg_ref.shape
    H = G // 4

    whh0 = whh0_ref[...]
    wih1 = wih1_ref[...]
    whh1 = whh1_ref[...]
    # broadcast once, outside the loop (broadcast_in_dim is not CSE'd)
    b1 = jnp.broadcast_to(b1_ref[...], (B, G))

    def gate_update(gates, c):
        # one sigmoid + one tanh over the full 128-lane gate vreg, then
        # static 32-lane slices (i|f|g|o each occupy their natural lanes)
        sg = jax.nn.sigmoid(gates)
        th = jnp.tanh(gates)
        i_g = sg[:, 0 * H:1 * H]
        f_g = sg[:, 1 * H:2 * H]
        g_g = th[:, 2 * H:3 * H]
        o_g = sg[:, 3 * H:4 * H]
        c_new = f_g * c + i_g * g_g
        h_new = o_g * jnp.tanh(c_new)
        return h_new, c_new

    h0 = jnp.zeros((B, H), jnp.float32)
    c0 = jnp.zeros((B, H), jnp.float32)
    h1 = jnp.zeros((B, H), jnp.float32)
    c1 = jnp.zeros((B, H), jnp.float32)

    # Fused 2-layer LSTM recurrence, statically unrolled (T small & fixed).
    for t in range(T):
        # layer-1 recurrent term first: it only needs h1_{t-1}, so this MXU
        # push can overlap layer-0's EUP (sigmoid/tanh) work.
        rec1 = jnp.dot(h1, whh1, preferred_element_type=jnp.float32)
        g0 = xg_ref[t] + jnp.dot(h0, whh0, preferred_element_type=jnp.float32)
        h0, c0 = gate_update(g0, c0)
        g1 = jnp.dot(h0, wih1, preferred_element_type=jnp.float32) + b1 + rec1
        h1, c1 = gate_update(g1, c1)

    # x = relu(dense(h_last))
    dense = jnp.maximum(
        jnp.dot(h1, wd_ref[...], preferred_element_type=jnp.float32)
        + bd_ref[...], 0.0)                                          # (B, 64)
    # out head: VPU multiply + lane reduce instead of an N=1 MXU matmul
    logit = jnp.sum(dense * wo_ref[...], axis=-1, keepdims=True) + bo_ref[...]
    out_ref[...] = jax.nn.sigmoid(logit)


def fake_news_classifier(tokens, params):
    """tokens: (B, T) int32.  Returns (B, 1) f32 sigmoid probabilities."""
    B, T = tokens.shape
    G = 4 * HIDDEN_DIM
    B_pad = ((B + B_TILE - 1) // B_TILE) * B_TILE

    # Pre-compose embedding with the layer-0 input projection: gather feeds
    # layer-0 gate pre-activations straight into the kernel.  (Table is tiny:
    # 64 x 128 f32.)  Dropout layers are identity at inference.
    gate_table = (jnp.dot(params["embedding"], params["wih0"], precision=HIGH)
                  + params["b0"])                                    # (V, 4H)
    xg = jnp.take(gate_table, tokens, axis=0).astype(jnp.float32)    # (B, T, 4H)
    xg = jnp.swapaxes(xg, 0, 1)                                      # (T, B, 4H)
    xg = jnp.pad(xg, ((0, 0), (0, B_pad - B), (0, 0)))               # sublane-full

    weights = (params["whh0"], params["wih1"], params["whh1"], params["b1"],
               params["wd"], params["bd"], params["wo"].T, params["bo"])

    def full_spec(a):
        n = a.ndim
        return pl.BlockSpec(a.shape, lambda b, _n=n: (0,) * _n)

    out = pl.pallas_call(
        _classifier_kernel,
        out_shape=jax.ShapeDtypeStruct((B_pad, 1), jnp.float32),
        grid=(B_pad // B_TILE,),
        in_specs=[pl.BlockSpec((T, B_TILE, G), lambda b: (0, b, 0))]
                 + [full_spec(w) for w in weights],
        # NOTE: 1-wide output is a masked vst; negligible at this batch size.
        out_specs=pl.BlockSpec((B_TILE, 1), lambda b: (b, 0)),
        compiler_params=pltpu.CompilerParams(
            dimension_semantics=("parallel",)),
    )(xg, *weights)
    return out[:B]


# --------------------------- pure-JAX reference ------------------------------
def _lstm_layer_ref(x, wih, whh, b):
    B, T, _ = x.shape
    H = whh.shape[0]

    def step(carry, x_t):
        h, c = carry
        gates = (jnp.dot(x_t, wih, precision=HIGH)
                 + jnp.dot(h, whh, precision=HIGH) + b)
        i, f, g, o = jnp.split(gates, 4, axis=-1)
        i, f, o = jax.nn.sigmoid(i), jax.nn.sigmoid(f), jax.nn.sigmoid(o)
        g = jnp.tanh(g)
        c = f * c + i * g
        h = o * jnp.tanh(c)
        return (h, c), h

    init = (jnp.zeros((B, H), jnp.float32), jnp.zeros((B, H), jnp.float32))
    _, hs = jax.lax.scan(step, init, jnp.swapaxes(x, 0, 1))
    return jnp.swapaxes(hs, 0, 1)


def reference_forward(tokens, params):
    x = jnp.take(params["embedding"], tokens, axis=0)
    x = _lstm_layer_ref(x, params["wih0"], params["whh0"], params["b0"])
    x = _lstm_layer_ref(x, params["wih1"], params["whh1"], params["b1"])
    x = x[:, -1, :]
    x = jnp.maximum(jnp.dot(x, params["wd"], precision=HIGH) + params["bd"], 0.0)
    return jax.nn.sigmoid(jnp.dot(x, params["wo"], precision=HIGH) + params["bo"])


# ------------------------------- main ----------------------------------------
def _init_params(key):
    ks = jax.random.split(key, 12)
    s = 0.1
    H4 = 4 * HIDDEN_DIM
    return {
        "embedding": s * jax.random.normal(ks[0], (VOCAB_SIZE, EMBED_DIM), jnp.float32),
        # layer 0 (input dim = EMBED_DIM); biases are (b_ih + b_hh) combined.
        "wih0": s * jax.random.normal(ks[1], (EMBED_DIM, H4), jnp.float32),
        "whh0": s * jax.random.normal(ks[2], (HIDDEN_DIM, H4), jnp.float32),
        "b0":   s * jax.random.normal(ks[3], (1, H4), jnp.float32),
        # layer 1 (input dim = HIDDEN_DIM)
        "wih1": s * jax.random.normal(ks[4], (HIDDEN_DIM, H4), jnp.float32),
        "whh1": s * jax.random.normal(ks[5], (HIDDEN_DIM, H4), jnp.float32),
        "b1":   s * jax.random.normal(ks[6], (1, H4), jnp.float32),
        # dense + out heads
        "wd": s * jax.random.normal(ks[7], (HIDDEN_DIM, DENSE_DIM), jnp.float32),
        "bd": s * jax.random.normal(ks[8], (1, DENSE_DIM), jnp.float32),
        "wo": s * jax.random.normal(ks[9], (DENSE_DIM, 1), jnp.float32),
        "bo": s * jax.random.normal(ks[10], (1, 1), jnp.float32),
    }


if __name__ == "__main__":
    key = jax.random.PRNGKey(0)
    k_tok, k_par = jax.random.split(key)
    tokens = jax.random.randint(k_tok, (BATCH, SEQ_LEN), 0, VOCAB_SIZE, jnp.int32)
    params = _init_params(k_par)

    out = jax.block_until_ready(fake_news_classifier(tokens, params))
    ref = jax.block_until_ready(reference_forward(tokens, params))

    assert out.shape == (BATCH, 1), out.shape
    assert jnp.allclose(out, ref, atol=5e-4, rtol=1e-4), (out, ref)

    print("KERNEL_OK")
</pallas_src>

<mosaic_0001>
module attributes {stable_mosaic.version = 11 : i64} {
  func.func @_classifier_kernel(%arg0: i32, %arg1: memref<8x8x128xf32, #tpu.memory_space<vmem>>, %arg2: memref<32x128xf32, #tpu.memory_space<vmem>>, %arg3: memref<32x128xf32, #tpu.memory_space<vmem>>, %arg4: memref<32x128xf32, #tpu.memory_space<vmem>>, %arg5: memref<1x128xf32, #tpu.memory_space<vmem>>, %arg6: memref<32x64xf32, #tpu.memory_space<vmem>>, %arg7: memref<1x64xf32, #tpu.memory_space<vmem>>, %arg8: memref<1x64xf32, #tpu.memory_space<vmem>>, %arg9: memref<1x1xf32, #tpu.memory_space<vmem>>, %arg10: memref<8x1xf32, #tpu.memory_space<vmem>>) attributes {dimension_semantics = [#tpu.dimension_semantics<parallel>], iteration_bounds = array<i64: 1>, scalar_prefetch = 0 : i64, scratch_operands = 0 : i64, tpu.core_type = #tpu.core_type<tc>, window_params = [{transform_indices = @transform_0, window_bounds = array<i64: 8, 8, 128>}, {pipeline_mode = #tpu.pipeline_mode<synchronous>, transform_indices = @transform_1, window_bounds = array<i64: 32, 128>}, {pipeline_mode = #tpu.pipeline_mode<synchronous>, transform_indices = @transform_2, window_bounds = array<i64: 32, 128>}, {pipeline_mode = #tpu.pipeline_mode<synchronous>, transform_indices = @transform_3, window_bounds = array<i64: 32, 128>}, {pipeline_mode = #tpu.pipeline_mode<synchronous>, transform_indices = @transform_4, window_bounds = array<i64: 1, 128>}, {pipeline_mode = #tpu.pipeline_mode<synchronous>, transform_indices = @transform_5, window_bounds = array<i64: 32, 64>}, {pipeline_mode = #tpu.pipeline_mode<synchronous>, transform_indices = @transform_6, window_bounds = array<i64: 1, 64>}, {pipeline_mode = #tpu.pipeline_mode<synchronous>, transform_indices = @transform_7, window_bounds = array<i64: 1, 64>}, {pipeline_mode = #tpu.pipeline_mode<synchronous>, transform_indices = @transform_8, window_bounds = array<i64: 1, 1>}, {transform_indices = @transform_9, window_bounds = array<i64: 8, 1>}]} {
    %c0 = arith.constant 0 : index
    %c0_0 = arith.constant 0 : index
    %0 = vector.load %arg2[%c0, %c0_0] : memref<32x128xf32, #tpu.memory_space<vmem>>, vector<32x128xf32>
    %c0_1 = arith.constant 0 : index
    %c0_2 = arith.constant 0 : index
    %1 = vector.load %arg3[%c0_1, %c0_2] : memref<32x128xf32, #tpu.memory_space<vmem>>, vector<32x128xf32>
    %c0_3 = arith.constant 0 : index
    %c0_4 = arith.constant 0 : index
    %2 = vector.load %arg4[%c0_3, %c0_4] : memref<32x128xf32, #tpu.memory_space<vmem>>, vector<32x128xf32>
    %c0_5 = arith.constant 0 : index
    %c0_6 = arith.constant 0 : index
    %3 = vector.load %arg5[%c0_5, %c0_6] : memref<1x128xf32, #tpu.memory_space<vmem>>, vector<1x128xf32>
    %4 = vector.shape_cast %3 : vector<1x128xf32> to vector<1x128xf32>
    %5 = vector.broadcast %4 : vector<1x128xf32> to vector<8x128xf32>
    %cst = arith.constant 0.000000e+00 : f32
    %6 = vector.broadcast %cst : f32 to vector<8x32xf32>
    %cst_7 = arith.constant 0.000000e+00 : f32
    %7 = vector.broadcast %cst_7 : f32 to vector<8x32xf32>
    %cst_8 = arith.constant 0.000000e+00 : f32
    %8 = vector.broadcast %cst_8 : f32 to vector<8x32xf32>
    %cst_9 = arith.constant 0.000000e+00 : f32
    %9 = vector.broadcast %cst_9 : f32 to vector<8x32xf32>
    %cst_10 = arith.constant dense<0.000000e+00> : vector<8x128xf32>
    %10 = tpu.matmul %8, %2, %cst_10 {dimension_numbers = #tpu.dot_dimension_numbers<[1], [0], [0], [1], [0, 0, 1, 1], [], []>} : vector<8x32xf32>, vector<32x128xf32>, vector<8x128xf32> -> vector<8x128xf32>
    %c0_11 = arith.constant 0 : index
    %c0_12 = arith.constant 0 : index
    %c0_13 = arith.constant 0 : index
    %11 = vector.load %arg1[%c0_11, %c0_12, %c0_13] : memref<8x8x128xf32, #tpu.memory_space<vmem>>, vector<1x8x128xf32>
    %12 = vector.shape_cast %11 : vector<1x8x128xf32> to vector<8x128xf32>
    %cst_14 = arith.constant dense<0.000000e+00> : vector<8x128xf32>
    %13 = tpu.matmul %6, %0, %cst_14 {dimension_numbers = #tpu.dot_dimension_numbers<[1], [0], [0], [1], [0, 0, 1, 1], [], []>} : vector<8x32xf32>, vector<32x128xf32>, vector<8x128xf32> -> vector<8x128xf32>
    %14 = arith.addf %12, %13 : vector<8x128xf32>
    %15 = arith.negf %14 : vector<8x128xf32>
    %16 = math.exp %15 : vector<8x128xf32>
    %cst_15 = arith.constant 1.000000e+00 : f32
    %17 = vector.broadcast %cst_15 : f32 to vector<8x128xf32>
    %18 = arith.addf %17, %16 : vector<8x128xf32>
    %19 = arith.divf %17, %18 : vector<8x128xf32>
    %20 = math.tanh %14 : vector<8x128xf32>
    %21 = vector.extract_strided_slice %19 {offsets = [0, 0], sizes = [8, 32], strides = [1, 1]} : vector<8x128xf32> to vector<8x32xf32>
    %22 = vector.extract_strided_slice %19 {offsets = [0, 32], sizes = [8, 32], strides = [1, 1]} : vector<8x128xf32> to vector<8x32xf32>
    %23 = vector.extract_strided_slice %20 {offsets = [0, 64], sizes = [8, 32], strides = [1, 1]} : vector<8x128xf32> to vector<8x32xf32>
    %24 = vector.extract_strided_slice %19 {offsets = [0, 96], sizes = [8, 32], strides = [1, 1]} : vector<8x128xf32> to vector<8x32xf32>
    %25 = arith.mulf %22, %7 : vector<8x32xf32>
    %26 = arith.mulf %21, %23 : vector<8x32xf32>
    %27 = arith.addf %25, %26 : vector<8x32xf32>
    %28 = math.tanh %27 : vector<8x32xf32>
    %29 = arith.mulf %24, %28 : vector<8x32xf32>
    %cst_16 = arith.constant dense<0.000000e+00> : vector<8x128xf32>
    %30 = tpu.matmul %29, %1, %cst_16 {dimension_numbers = #tpu.dot_dimension_numbers<[1], [0], [0], [1], [0, 0, 1, 1], [], []>} : vector<8x32xf32>, vector<32x128xf32>, vector<8x128xf32> -> vector<8x128xf32>
    %31 = arith.addf %30, %5 : vector<8x128xf32>
    %32 = arith.addf %31, %10 : vector<8x128xf32>
    %33 = arith.negf %32 : vector<8x128xf32>
    %34 = math.exp %33 : vector<8x128xf32>
    %cst_17 = arith.constant 1.000000e+00 : f32
    %35 = vector.broadcast %cst_17 : f32 to vector<8x128xf32>
    %36 = arith.addf %35, %34 : vector<8x128xf32>
    %37 = arith.divf %35, %36 : vector<8x128xf32>
    %38 = math.tanh %32 : vector<8x128xf32>
    %39 = vector.extract_strided_slice %37 {offsets = [0, 0], sizes = [8, 32], strides = [1, 1]} : vector<8x128xf32> to vector<8x32xf32>
    %40 = vector.extract_strided_slice %37 {offsets = [0, 32], sizes = [8, 32], strides = [1, 1]} : vector<8x128xf32> to vector<8x32xf32>
    %41 = vector.extract_strided_slice %38 {offsets = [0, 64], sizes = [8, 32], strides = [1, 1]} : vector<8x128xf32> to vector<8x32xf32>
    %42 = vector.extract_strided_slice %37 {offsets = [0, 96], sizes = [8, 32], strides = [1, 1]} : vector<8x128xf32> to vector<8x32xf32>
    %43 = arith.mulf %40, %9 : vector<8x32xf32>
    %44 = arith.mulf %39, %41 : vector<8x32xf32>
    %45 = arith.addf %43, %44 : vector<8x32xf32>
    %46 = math.tanh %45 : vector<8x32xf32>
    %47 = arith.mulf %42, %46 : vector<8x32xf32>
    %cst_18 = arith.constant dense<0.000000e+00> : vector<8x128xf32>
    %48 = tpu.matmul %47, %2, %cst_18 {dimension_numbers = #tpu.dot_dimension_numbers<[1], [0], [0], [1], [0, 0, 1, 1], [], []>} : vector<8x32xf32>, vector<32x128xf32>, vector<8x128xf32> -> vector<8x128xf32>
    %c1 = arith.constant 1 : index
    %c0_19 = arith.constant 0 : index
    %c0_20 = arith.constant 0 : index
    %49 = vector.load %arg1[%c1, %c0_19, %c0_20] : memref<8x8x128xf32, #tpu.memory_space<vmem>>, vector<1x8x128xf32>
    %50 = vector.shape_cast %49 : vector<1x8x128xf32> to vector<8x128xf32>
    %cst_21 = arith.constant dense<0.000000e+00> : vector<8x128xf32>
    %51 = tpu.matmul %29, %0, %cst_21 {dimension_numbers = #tpu.dot_dimension_numbers<[1], [0], [0], [1], [0, 0, 1, 1], [], []>} : vector<8x32xf32>, vector<32x128xf32>, vector<8x128xf32> -> vector<8x128xf32>
    %52 = arith.addf %50, %51 : vector<8x128xf32>
    %53 = arith.negf %52 : vector<8x128xf32>
    %54 = math.exp %53 : vector<8x128xf32>
    %cst_22 = arith.constant 1.000000e+00 : f32
    %55 = vector.broadcast %cst_22 : f32 to vector<8x128xf32>
    %56 = arith.addf %55, %54 : vector<8x128xf32>
    %57 = arith.divf %55, %56 : vector<8x128xf32>
    %58 = math.tanh %52 : vector<8x128xf32>
    %59 = vector.extract_strided_slice %57 {offsets = [0, 0], sizes = [8, 32], strides = [1, 1]} : vector<8x128xf32> to vector<8x32xf32>
    %60 = vector.extract_strided_slice %57 {offsets = [0, 32], sizes = [8, 32], strides = [1, 1]} : vector<8x128xf32> to vector<8x32xf32>
    %61 = vector.extract_strided_slice %58 {offsets = [0, 64], sizes = [8, 32], strides = [1, 1]} : vector<8x128xf32> to vector<8x32xf32>
    %62 = vector.extract_strided_slice %57 {offsets = [0, 96], sizes = [8, 32], strides = [1, 1]} : vector<8x128xf32> to vector<8x32xf32>
    %63 = arith.mulf %60, %27 : vector<8x32xf32>
    %64 = arith.mulf %59, %61 : vector<8x32xf32>
    %65 = arith.addf %63, %64 : vector<8x32xf32>
    %66 = math.tanh %65 : vector<8x32xf32>
    %67 = arith.mulf %62, %66 : vector<8x32xf32>
    %cst_23 = arith.constant dense<0.000000e+00> : vector<8x128xf32>
    %68 = tpu.matmul %67, %1, %cst_23 {dimension_numbers = #tpu.dot_dimension_numbers<[1], [0], [0], [1], [0, 0, 1, 1], [], []>} : vector<8x32xf32>, vector<32x128xf32>, vector<8x128xf32> -> vector<8x128xf32>
    %69 = arith.addf %68, %5 : vector<8x128xf32>
    %70 = arith.addf %69, %48 : vector<8x128xf32>
    %71 = arith.negf %70 : vector<8x128xf32>
    %72 = math.exp %71 : vector<8x128xf32>
    %cst_24 = arith.constant 1.000000e+00 : f32
    %73 = vector.broadcast %cst_24 : f32 to vector<8x128xf32>
    %74 = arith.addf %73, %72 : vector<8x128xf32>
    %75 = arith.divf %73, %74 : vector<8x128xf32>
    %76 = math.tanh %70 : vector<8x128xf32>
    %77 = vector.extract_strided_slice %75 {offsets = [0, 0], sizes = [8, 32], strides = [1, 1]} : vector<8x128xf32> to vector<8x32xf32>
    %78 = vector.extract_strided_slice %75 {offsets = [0, 32], sizes = [8, 32], strides = [1, 1]} : vector<8x128xf32> to vector<8x32xf32>
    %79 = vector.extract_strided_slice %76 {offsets = [0, 64], sizes = [8, 32], strides = [1, 1]} : vector<8x128xf32> to vector<8x32xf32>
    %80 = vector.extract_strided_slice %75 {offsets = [0, 96], sizes = [8, 32], strides = [1, 1]} : vector<8x128xf32> to vector<8x32xf32>
    %81 = arith.mulf %78, %45 : vector<8x32xf32>
    %82 = arith.mulf %77, %79 : vector<8x32xf32>
    %83 = arith.addf %81, %82 : vector<8x32xf32>
    %84 = math.tanh %83 : vector<8x32xf32>
    %85 = arith.mulf %80, %84 : vector<8x32xf32>
    %cst_25 = arith.constant dense<0.000000e+00> : vector<8x128xf32>
    %86 = tpu.matmul %85, %2, %cst_25 {dimension_numbers = #tpu.dot_dimension_numbers<[1], [0], [0], [1], [0, 0, 1, 1], [], []>} : vector<8x32xf32>, vector<32x128xf32>, vector<8x128xf32> -> vector<8x128xf32>
    %c2 = arith.constant 2 : index
    %c0_26 = arith.constant 0 : index
    %c0_27 = arith.constant 0 : index
    %87 = vector.load %arg1[%c2, %c0_26, %c0_27] : memref<8x8x128xf32, #tpu.memory_space<vmem>>, vector<1x8x128xf32>
    %88 = vector.shape_cast %87 : vector<1x8x128xf32> to vector<8x128xf32>
    %cst_28 = arith.constant dense<0.000000e+00> : vector<8x128xf32>
    %89 = tpu.matmul %67, %0, %cst_28 {dimension_numbers = #tpu.dot_dimension_numbers<[1], [0], [0], [1], [0, 0, 1, 1], [], []>} : vector<8x32xf32>, vector<32x128xf32>, vector<8x128xf32> -> vector<8x128xf32>
    %90 = arith.addf %88, %89 : vector<8x128xf32>
    %91 = arith.negf %90 : vector<8x128xf32>
    %92 = math.exp %91 : vector<8x128xf32>
    %cst_29 = arith.constant 1.000000e+00 : f32
    %93 = vector.broadcast %cst_29 : f32 to vector<8x128xf32>
    %94 = arith.addf %93, %92 : vector<8x128xf32>
    %95 = arith.divf %93, %94 : vector<8x128xf32>
    %96 = math.tanh %90 : vector<8x128xf32>
    %97 = vector.extract_strided_slice %95 {offsets = [0, 0], sizes = [8, 32], strides = [1, 1]} : vector<8x128xf32> to vector<8x32xf32>
    %98 = vector.extract_strided_slice %95 {offsets = [0, 32], sizes = [8, 32], strides = [1, 1]} : vector<8x128xf32> to vector<8x32xf32>
    %99 = vector.extract_strided_slice %96 {offsets = [0, 64], sizes = [8, 32], strides = [1, 1]} : vector<8x128xf32> to vector<8x32xf32>
    %100 = vector.extract_strided_slice %95 {offsets = [0, 96], sizes = [8, 32], strides = [1, 1]} : vector<8x128xf32> to vector<8x32xf32>
    %101 = arith.mulf %98, %65 : vector<8x32xf32>
    %102 = arith.mulf %97, %99 : vector<8x32xf32>
    %103 = arith.addf %101, %102 : vector<8x32xf32>
    %104 = math.tanh %103 : vector<8x32xf32>
    %105 = arith.mulf %100, %104 : vector<8x32xf32>
    %cst_30 = arith.constant dense<0.000000e+00> : vector<8x128xf32>
    %106 = tpu.matmul %105, %1, %cst_30 {dimension_numbers = #tpu.dot_dimension_numbers<[1], [0], [0], [1], [0, 0, 1, 1], [], []>} : vector<8x32xf32>, vector<32x128xf32>, vector<8x128xf32> -> vector<8x128xf32>
    %107 = arith.addf %106, %5 : vector<8x128xf32>
    %108 = arith.addf %107, %86 : vector<8x128xf32>
    %109 = arith.negf %108 : vector<8x128xf32>
    %110 = math.exp %109 : vector<8x128xf32>
    %cst_31 = arith.constant 1.000000e+00 : f32
    %111 = vector.broadcast %cst_31 : f32 to vector<8x128xf32>
    %112 = arith.addf %111, %110 : vector<8x128xf32>
    %113 = arith.divf %111, %112 : vector<8x128xf32>
    %114 = math.tanh %108 : vector<8x128xf32>
    %115 = vector.extract_strided_slice %113 {offsets = [0, 0], sizes = [8, 32], strides = [1, 1]} : vector<8x128xf32> to vector<8x32xf32>
    %116 = vector.extract_strided_slice %113 {offsets = [0, 32], sizes = [8, 32], strides = [1, 1]} : vector<8x128xf32> to vector<8x32xf32>
    %117 = vector.extract_strided_slice %114 {offsets = [0, 64], sizes = [8, 32], strides = [1, 1]} : vector<8x128xf32> to vector<8x32xf32>
    %118 = vector.extract_strided_slice %113 {offsets = [0, 96], sizes = [8, 32], strides = [1, 1]} : vector<8x128xf32> to vector<8x32xf32>
    %119 = arith.mulf %116, %83 : vector<8x32xf32>
    %120 = arith.mulf %115, %117 : vector<8x32xf32>
    %121 = arith.addf %119, %120 : vector<8x32xf32>
    %122 = math.tanh %121 : vector<8x32xf32>
    %123 = arith.mulf %118, %122 : vector<8x32xf32>
    %cst_32 = arith.constant dense<0.000000e+00> : vector<8x128xf32>
    %124 = tpu.matmul %123, %2, %cst_32 {dimension_numbers = #tpu.dot_dimension_numbers<[1], [0], [0], [1], [0, 0, 1, 1], [], []>} : vector<8x32xf32>, vector<32x128xf32>, vector<8x128xf32> -> vector<8x128xf32>
    %c3 = arith.constant 3 : index
    %c0_33 = arith.constant 0 : index
    %c0_34 = arith.constant 0 : index
    %125 = vector.load %arg1[%c3, %c0_33, %c0_34] : memref<8x8x128xf32, #tpu.memory_space<vmem>>, vector<1x8x128xf32>
    %126 = vector.shape_cast %125 : vector<1x8x128xf32> to vector<8x128xf32>
    %cst_35 = arith.constant dense<0.000000e+00> : vector<8x128xf32>
    %127 = tpu.matmul %105, %0, %cst_35 {dimension_numbers = #tpu.dot_dimension_numbers<[1], [0], [0], [1], [0, 0, 1, 1], [], []>} : vector<8x32xf32>, vector<32x128xf32>, vector<8x128xf32> -> vector<8x128xf32>
    %128 = arith.addf %126, %127 : vector<8x128xf32>
    %129 = arith.negf %128 : vector<8x128xf32>
    %130 = math.exp %129 : vector<8x128xf32>
    %cst_36 = arith.constant 1.000000e+00 : f32
    %131 = vector.broadcast %cst_36 : f32 to vector<8x128xf32>
    %132 = arith.addf %131, %130 : vector<8x128xf32>
    %133 = arith.divf %131, %132 : vector<8x128xf32>
    %134 = math.tanh %128 : vector<8x128xf32>
    %135 = vector.extract_strided_slice %133 {offsets = [0, 0], sizes = [8, 32], strides = [1, 1]} : vector<8x128xf32> to vector<8x32xf32>
    %136 = vector.extract_strided_slice %133 {offsets = [0, 32], sizes = [8, 32], strides = [1, 1]} : vector<8x128xf32> to vector<8x32xf32>
    %137 = vector.extract_strided_slice %134 {offsets = [0, 64], sizes = [8, 32], strides = [1, 1]} : vector<8x128xf32> to vector<8x32xf32>
    %138 = vector.extract_strided_slice %133 {offsets = [0, 96], sizes = [8, 32], strides = [1, 1]} : vector<8x128xf32> to vector<8x32xf32>
    %139 = arith.mulf %136, %103 : vector<8x32xf32>
    %140 = arith.mulf %135, %137 : vector<8x32xf32>
    %141 = arith.addf %139, %140 : vector<8x32xf32>
    %142 = math.tanh %141 : vector<8x32xf32>
    %143 = arith.mulf %138, %142 : vector<8x32xf32>
    %cst_37 = arith.constant dense<0.000000e+00> : vector<8x128xf32>
    %144 = tpu.matmul %143, %1, %cst_37 {dimension_numbers = #tpu.dot_dimension_numbers<[1], [0], [0], [1], [0, 0, 1, 1], [], []>} : vector<8x32xf32>, vector<32x128xf32>, vector<8x128xf32> -> vector<8x128xf32>
    %145 = arith.addf %144, %5 : vector<8x128xf32>
    %146 = arith.addf %145, %124 : vector<8x128xf32>
    %147 = arith.negf %146 : vector<8x128xf32>
    %148 = math.exp %147 : vector<8x128xf32>
    %cst_38 = arith.constant 1.000000e+00 : f32
    %149 = vector.broadcast %cst_38 : f32 to vector<8x128xf32>
    %150 = arith.addf %149, %148 : vector<8x128xf32>
    %151 = arith.divf %149, %150 : vector<8x128xf32>
    %152 = math.tanh %146 : vector<8x128xf32>
    %153 = vector.extract_strided_slice %151 {offsets = [0, 0], sizes = [8, 32], strides = [1, 1]} : vector<8x128xf32> to vector<8x32xf32>
    %154 = vector.extract_strided_slice %151 {offsets = [0, 32], sizes = [8, 32], strides = [1, 1]} : vector<8x128xf32> to vector<8x32xf32>
    %155 = vector.extract_strided_slice %152 {offsets = [0, 64], sizes = [8, 32], strides = [1, 1]} : vector<8x128xf32> to vector<8x32xf32>
    %156 = vector.extract_strided_slice %151 {offsets = [0, 96], sizes = [8, 32], strides = [1, 1]} : vector<8x128xf32> to vector<8x32xf32>
    %157 = arith.mulf %154, %121 : vector<8x32xf32>
    %158 = arith.mulf %153, %155 : vector<8x32xf32>
    %159 = arith.addf %157, %158 : vector<8x32xf32>
    %160 = math.tanh %159 : vector<8x32xf32>
    %161 = arith.mulf %156, %160 : vector<8x32xf32>
    %cst_39 = arith.constant dense<0.000000e+00> : vector<8x128xf32>
    %162 = tpu.matmul %161, %2, %cst_39 {dimension_numbers = #tpu.dot_dimension_numbers<[1], [0], [0], [1], [0, 0, 1, 1], [], []>} : vector<8x32xf32>, vector<32x128xf32>, vector<8x128xf32> -> vector<8x128xf32>
    %c4 = arith.constant 4 : index
    %c0_40 = arith.constant 0 : index
    %c0_41 = arith.constant 0 : index
    %163 = vector.load %arg1[%c4, %c0_40, %c0_41] : memref<8x8x128xf32, #tpu.memory_space<vmem>>, vector<1x8x128xf32>
    %164 = vector.shape_cast %163 : vector<1x8x128xf32> to vector<8x128xf32>
    %cst_42 = arith.constant dense<0.000000e+00> : vector<8x128xf32>
    %165 = tpu.matmul %143, %0, %cst_42 {dimension_numbers = #tpu.dot_dimension_numbers<[1], [0], [0], [1], [0, 0, 1, 1], [], []>} : vector<8x32xf32>, vector<32x128xf32>, vector<8x128xf32> -> vector<8x128xf32>
    %166 = arith.addf %164, %165 : vector<8x128xf32>
    %167 = arith.negf %166 : vector<8x128xf32>
    %168 = math.exp %167 : vector<8x128xf32>
    %cst_43 = arith.constant 1.000000e+00 : f32
    %169 = vector.broadcast %cst_43 : f32 to vector<8x128xf32>
    %170 = arith.addf %169, %168 : vector<8x128xf32>
    %171 = arith.divf %169, %170 : vector<8x128xf32>
    %172 = math.tanh %166 : vector<8x128xf32>
    %173 = vector.extract_strided_slice %171 {offsets = [0, 0], sizes = [8, 32], strides = [1, 1]} : vector<8x128xf32> to vector<8x32xf32>
    %174 = vector.extract_strided_slice %171 {offsets = [0, 32], sizes = [8, 32], strides = [1, 1]} : vector<8x128xf32> to vector<8x32xf32>
    %175 = vector.extract_strided_slice %172 {offsets = [0, 64], sizes = [8, 32], strides = [1, 1]} : vector<8x128xf32> to vector<8x32xf32>
    %176 = vector.extract_strided_slice %171 {offsets = [0, 96], sizes = [8, 32], strides = [1, 1]} : vector<8x128xf32> to vector<8x32xf32>
    %177 = arith.mulf %174, %141 : vector<8x32xf32>
    %178 = arith.mulf %173, %175 : vector<8x32xf32>
    %179 = arith.addf %177, %178 : vector<8x32xf32>
    %180 = math.tanh %179 : vector<8x32xf32>
    %181 = arith.mulf %176, %180 : vector<8x32xf32>
    %cst_44 = arith.constant dense<0.000000e+00> : vector<8x128xf32>
    %182 = tpu.matmul %181, %1, %cst_44 {dimension_numbers = #tpu.dot_dimension_numbers<[1], [0], [0], [1], [0, 0, 1, 1], [], []>} : vector<8x32xf32>, vector<32x128xf32>, vector<8x128xf32> -> vector<8x128xf32>
    %183 = arith.addf %182, %5 : vector<8x128xf32>
    %184 = arith.addf %183, %162 : vector<8x128xf32>
    %185 = arith.negf %184 : vector<8x128xf32>
    %186 = math.exp %185 : vector<8x128xf32>
    %cst_45 = arith.constant 1.000000e+00 : f32
    %187 = vector.broadcast %cst_45 : f32 to vector<8x128xf32>
    %188 = arith.addf %187, %186 : vector<8x128xf32>
    %189 = arith.divf %187, %188 : vector<8x128xf32>
    %190 = math.tanh %184 : vector<8x128xf32>
    %191 = vector.extract_strided_slice %189 {offsets = [0, 0], sizes = [8, 32], strides = [1, 1]} : vector<8x128xf32> to vector<8x32xf32>
    %192 = vector.extract_strided_slice %189 {offsets = [0, 32], sizes = [8, 32], strides = [1, 1]} : vector<8x128xf32> to vector<8x32xf32>
    %193 = vector.extract_strided_slice %190 {offsets = [0, 64], sizes = [8, 32], strides = [1, 1]} : vector<8x128xf32> to vector<8x32xf32>
    %194 = vector.extract_strided_slice %189 {offsets = [0, 96], sizes = [8, 32], strides = [1, 1]} : vector<8x128xf32> to vector<8x32xf32>
    %195 = arith.mulf %192, %159 : vector<8x32xf32>
    %196 = arith.mulf %191, %193 : vector<8x32xf32>
    %197 = arith.addf %195, %196 : vector<8x32xf32>
    %198 = math.tanh %197 : vector<8x32xf32>
    %199 = arith.mulf %194, %198 : vector<8x32xf32>
    %cst_46 = arith.constant dense<0.000000e+00> : vector<8x128xf32>
    %200 = tpu.matmul %199, %2, %cst_46 {dimension_numbers = #tpu.dot_dimension_numbers<[1], [0], [0], [1], [0, 0, 1, 1], [], []>} : vector<8x32xf32>, vector<32x128xf32>, vector<8x128xf32> -> vector<8x128xf32>
    %c5 = arith.constant 5 : index
    %c0_47 = arith.constant 0 : index
    %c0_48 = arith.constant 0 : index
    %201 = vector.load %arg1[%c5, %c0_47, %c0_48] : memref<8x8x128xf32, #tpu.memory_space<vmem>>, vector<1x8x128xf32>
    %202 = vector.shape_cast %201 : vector<1x8x128xf32> to vector<8x128xf32>
    %cst_49 = arith.constant dense<0.000000e+00> : vector<8x128xf32>
    %203 = tpu.matmul %181, %0, %cst_49 {dimension_numbers = #tpu.dot_dimension_numbers<[1], [0], [0], [1], [0, 0, 1, 1], [], []>} : vector<8x32xf32>, vector<32x128xf32>, vector<8x128xf32> -> vector<8x128xf32>
    %204 = arith.addf %202, %203 : vector<8x128xf32>
    %205 = arith.negf %204 : vector<8x128xf32>
    %206 = math.exp %205 : vector<8x128xf32>
    %cst_50 = arith.constant 1.000000e+00 : f32
    %207 = vector.broadcast %cst_50 : f32 to vector<8x128xf32>
    %208 = arith.addf %207, %206 : vector<8x128xf32>
    %209 = arith.divf %207, %208 : vector<8x128xf32>
    %210 = math.tanh %204 : vector<8x128xf32>
    %211 = vector.extract_strided_slice %209 {offsets = [0, 0], sizes = [8, 32], strides = [1, 1]} : vector<8x128xf32> to vector<8x32xf32>
    %212 = vector.extract_strided_slice %209 {offsets = [0, 32], sizes = [8, 32], strides = [1, 1]} : vector<8x128xf32> to vector<8x32xf32>
    %213 = vector.extract_strided_slice %210 {offsets = [0, 64], sizes = [8, 32], strides = [1, 1]} : vector<8x128xf32> to vector<8x32xf32>
    %214 = vector.extract_strided_slice %209 {offsets = [0, 96], sizes = [8, 32], strides = [1, 1]} : vector<8x128xf32> to vector<8x32xf32>
    %215 = arith.mulf %212, %179 : vector<8x32xf32>
    %216 = arith.mulf %211, %213 : vector<8x32xf32>
    %217 = arith.addf %215, %216 : vector<8x32xf32>
    %218 = math.tanh %217 : vector<8x32xf32>
    %219 = arith.mulf %214, %218 : vector<8x32xf32>
    %cst_51 = arith.constant dense<0.000000e+00> : vector<8x128xf32>
    %220 = tpu.matmul %219, %1, %cst_51 {dimension_numbers = #tpu.dot_dimension_numbers<[1], [0], [0], [1], [0, 0, 1, 1], [], []>} : vector<8x32xf32>, vector<32x128xf32>, vector<8x128xf32> -> vector<8x128xf32>
    %221 = arith.addf %220, %5 : vector<8x128xf32>
    %222 = arith.addf %221, %200 : vector<8x128xf32>
    %223 = arith.negf %222 : vector<8x128xf32>
    %224 = math.exp %223 : vector<8x128xf32>
    %cst_52 = arith.constant 1.000000e+00 : f32
    %225 = vector.broadcast %cst_52 : f32 to vector<8x128xf32>
    %226 = arith.addf %225, %224 : vector<8x128xf32>
    %227 = arith.divf %225, %226 : vector<8x128xf32>
    %228 = math.tanh %222 : vector<8x128xf32>
    %229 = vector.extract_strided_slice %227 {offsets = [0, 0], sizes = [8, 32], strides = [1, 1]} : vector<8x128xf32> to vector<8x32xf32>
    %230 = vector.extract_strided_slice %227 {offsets = [0, 32], sizes = [8, 32], strides = [1, 1]} : vector<8x128xf32> to vector<8x32xf32>
    %231 = vector.extract_strided_slice %228 {offsets = [0, 64], sizes = [8, 32], strides = [1, 1]} : vector<8x128xf32> to vector<8x32xf32>
    %232 = vector.extract_strided_slice %227 {offsets = [0, 96], sizes = [8, 32], strides = [1, 1]} : vector<8x128xf32> to vector<8x32xf32>
    %233 = arith.mulf %230, %197 : vector<8x32xf32>
    %234 = arith.mulf %229, %231 : vector<8x32xf32>
    %235 = arith.addf %233, %234 : vector<8x32xf32>
    %236 = math.tanh %235 : vector<8x32xf32>
    %237 = arith.mulf %232, %236 : vector<8x32xf32>
    %cst_53 = arith.constant dense<0.000000e+00> : vector<8x128xf32>
    %238 = tpu.matmul %237, %2, %cst_53 {dimension_numbers = #tpu.dot_dimension_numbers<[1], [0], [0], [1], [0, 0, 1, 1], [], []>} : vector<8x32xf32>, vector<32x128xf32>, vector<8x128xf32> -> vector<8x128xf32>
    %c6 = arith.constant 6 : index
    %c0_54 = arith.constant 0 : index
    %c0_55 = arith.constant 0 : index
    %239 = vector.load %arg1[%c6, %c0_54, %c0_55] : memref<8x8x128xf32, #tpu.memory_space<vmem>>, vector<1x8x128xf32>
    %240 = vector.shape_cast %239 : vector<1x8x128xf32> to vector<8x128xf32>
    %cst_56 = arith.constant dense<0.000000e+00> : vector<8x128xf32>
    %241 = tpu.matmul %219, %0, %cst_56 {dimension_numbers = #tpu.dot_dimension_numbers<[1], [0], [0], [1], [0, 0, 1, 1], [], []>} : vector<8x32xf32>, vector<32x128xf32>, vector<8x128xf32> -> vector<8x128xf32>
    %242 = arith.addf %240, %241 : vector<8x128xf32>
    %243 = arith.negf %242 : vector<8x128xf32>
    %244 = math.exp %243 : vector<8x128xf32>
    %cst_57 = arith.constant 1.000000e+00 : f32
    %245 = vector.broadcast %cst_57 : f32 to vector<8x128xf32>
    %246 = arith.addf %245, %244 : vector<8x128xf32>
    %247 = arith.divf %245, %246 : vector<8x128xf32>
    %248 = math.tanh %242 : vector<8x128xf32>
    %249 = vector.extract_strided_slice %247 {offsets = [0, 0], sizes = [8, 32], strides = [1, 1]} : vector<8x128xf32> to vector<8x32xf32>
    %250 = vector.extract_strided_slice %247 {offsets = [0, 32], sizes = [8, 32], strides = [1, 1]} : vector<8x128xf32> to vector<8x32xf32>
    %251 = vector.extract_strided_slice %248 {offsets = [0, 64], sizes = [8, 32], strides = [1, 1]} : vector<8x128xf32> to vector<8x32xf32>
    %252 = vector.extract_strided_slice %247 {offsets = [0, 96], sizes = [8, 32], strides = [1, 1]} : vector<8x128xf32> to vector<8x32xf32>
    %253 = arith.mulf %250, %217 : vector<8x32xf32>
    %254 = arith.mulf %249, %251 : vector<8x32xf32>
    %255 = arith.addf %253, %254 : vector<8x32xf32>
    %256 = math.tanh %255 : vector<8x32xf32>
    %257 = arith.mulf %252, %256 : vector<8x32xf32>
    %cst_58 = arith.constant dense<0.000000e+00> : vector<8x128xf32>
    %258 = tpu.matmul %257, %1, %cst_58 {dimension_numbers = #tpu.dot_dimension_numbers<[1], [0], [0], [1], [0, 0, 1, 1], [], []>} : vector<8x32xf32>, vector<32x128xf32>, vector<8x128xf32> -> vector<8x128xf32>
    %259 = arith.addf %258, %5 : vector<8x128xf32>
    %260 = arith.addf %259, %238 : vector<8x128xf32>
    %261 = arith.negf %260 : vector<8x128xf32>
    %262 = math.exp %261 : vector<8x128xf32>
    %cst_59 = arith.constant 1.000000e+00 : f32
    %263 = vector.broadcast %cst_59 : f32 to vector<8x128xf32>
    %264 = arith.addf %263, %262 : vector<8x128xf32>
    %265 = arith.divf %263, %264 : vector<8x128xf32>
    %266 = math.tanh %260 : vector<8x128xf32>
    %267 = vector.extract_strided_slice %265 {offsets = [0, 0], sizes = [8, 32], strides = [1, 1]} : vector<8x128xf32> to vector<8x32xf32>
    %268 = vector.extract_strided_slice %265 {offsets = [0, 32], sizes = [8, 32], strides = [1, 1]} : vector<8x128xf32> to vector<8x32xf32>
    %269 = vector.extract_strided_slice %266 {offsets = [0, 64], sizes = [8, 32], strides = [1, 1]} : vector<8x128xf32> to vector<8x32xf32>
    %270 = vector.extract_strided_slice %265 {offsets = [0, 96], sizes = [8, 32], strides = [1, 1]} : vector<8x128xf32> to vector<8x32xf32>
    %271 = arith.mulf %268, %235 : vector<8x32xf32>
    %272 = arith.mulf %267, %269 : vector<8x32xf32>
    %273 = arith.addf %271, %272 : vector<8x32xf32>
    %274 = math.tanh %273 : vector<8x32xf32>
    %275 = arith.mulf %270, %274 : vector<8x32xf32>
    %cst_60 = arith.constant dense<0.000000e+00> : vector<8x128xf32>
    %276 = tpu.matmul %275, %2, %cst_60 {dimension_numbers = #tpu.dot_dimension_numbers<[1], [0], [0], [1], [0, 0, 1, 1], [], []>} : vector<8x32xf32>, vector<32x128xf32>, vector<8x128xf32> -> vector<8x128xf32>
    %c7 = arith.constant 7 : index
    %c0_61 = arith.constant 0 : index
    %c0_62 = arith.constant 0 : index
    %277 = vector.load %arg1[%c7, %c0_61, %c0_62] : memref<8x8x128xf32, #tpu.memory_space<vmem>>, vector<1x8x128xf32>
    %278 = vector.shape_cast %277 : vector<1x8x128xf32> to vector<8x128xf32>
    %cst_63 = arith.constant dense<0.000000e+00> : vector<8x128xf32>
    %279 = tpu.matmul %257, %0, %cst_63 {dimension_numbers = #tpu.dot_dimension_numbers<[1], [0], [0], [1], [0, 0, 1, 1], [], []>} : vector<8x32xf32>, vector<32x128xf32>, vector<8x128xf32> -> vector<8x128xf32>
    %280 = arith.addf %278, %279 : vector<8x128xf32>
    %281 = arith.negf %280 : vector<8x128xf32>
    %282 = math.exp %281 : vector<8x128xf32>
    %cst_64 = arith.constant 1.000000e+00 : f32
    %283 = vector.broadcast %cst_64 : f32 to vector<8x128xf32>
    %284 = arith.addf %283, %282 : vector<8x128xf32>
    %285 = arith.divf %283, %284 : vector<8x128xf32>
    %286 = math.tanh %280 : vector<8x128xf32>
    %287 = vector.extract_strided_slice %285 {offsets = [0, 0], sizes = [8, 32], strides = [1, 1]} : vector<8x128xf32> to vector<8x32xf32>
    %288 = vector.extract_strided_slice %285 {offsets = [0, 32], sizes = [8, 32], strides = [1, 1]} : vector<8x128xf32> to vector<8x32xf32>
    %289 = vector.extract_strided_slice %286 {offsets = [0, 64], sizes = [8, 32], strides = [1, 1]} : vector<8x128xf32> to vector<8x32xf32>
    %290 = vector.extract_strided_slice %285 {offsets = [0, 96], sizes = [8, 32], strides = [1, 1]} : vector<8x128xf32> to vector<8x32xf32>
    %291 = arith.mulf %288, %255 : vector<8x32xf32>
    %292 = arith.mulf %287, %289 : vector<8x32xf32>
    %293 = arith.addf %291, %292 : vector<8x32xf32>
    %294 = math.tanh %293 : vector<8x32xf32>
    %295 = arith.mulf %290, %294 : vector<8x32xf32>
    %cst_65 = arith.constant dense<0.000000e+00> : vector<8x128xf32>
    %296 = tpu.matmul %295, %1, %cst_65 {dimension_numbers = #tpu.dot_dimension_numbers<[1], [0], [0], [1], [0, 0, 1, 1], [], []>} : vector<8x32xf32>, vector<32x128xf32>, vector<8x128xf32> -> vector<8x128xf32>
    %297 = arith.addf %296, %5 : vector<8x128xf32>
    %298 = arith.addf %297, %276 : vector<8x128xf32>
    %299 = arith.negf %298 : vector<8x128xf32>
    %300 = math.exp %299 : vector<8x128xf32>
    %cst_66 = arith.constant 1.000000e+00 : f32
    %301 = vector.broadcast %cst_66 : f32 to vector<8x128xf32>
    %302 = arith.addf %301, %300 : vector<8x128xf32>
    %303 = arith.divf %301, %302 : vector<8x128xf32>
    %304 = math.tanh %298 : vector<8x128xf32>
    %305 = vector.extract_strided_slice %303 {offsets = [0, 0], sizes = [8, 32], strides = [1, 1]} : vector<8x128xf32> to vector<8x32xf32>
    %306 = vector.extract_strided_slice %303 {offsets = [0, 32], sizes = [8, 32], strides = [1, 1]} : vector<8x128xf32> to vector<8x32xf32>
    %307 = vector.extract_strided_slice %304 {offsets = [0, 64], sizes = [8, 32], strides = [1, 1]} : vector<8x128xf32> to vector<8x32xf32>
    %308 = vector.extract_strided_slice %303 {offsets = [0, 96], sizes = [8, 32], strides = [1, 1]} : vector<8x128xf32> to vector<8x32xf32>
    %309 = arith.mulf %306, %273 : vector<8x32xf32>
    %310 = arith.mulf %305, %307 : vector<8x32xf32>
    %311 = arith.addf %309, %310 : vector<8x32xf32>
    %312 = math.tanh %311 : vector<8x32xf32>
    %313 = arith.mulf %308, %312 : vector<8x32xf32>
    %c0_67 = arith.constant 0 : index
    %c0_68 = arith.constant 0 : index
    %314 = vector.load %arg6[%c0_67, %c0_68] : memref<32x64xf32, #tpu.memory_space<vmem>>, vector<32x64xf32>
    %cst_69 = arith.constant dense<0.000000e+00> : vector<8x64xf32>
    %315 = tpu.matmul %313, %314, %cst_69 {dimension_numbers = #tpu.dot_dimension_numbers<[1], [0], [0], [1], [0, 0, 1, 1], [], []>} : vector<8x32xf32>, vector<32x64xf32>, vector<8x64xf32> -> vector<8x64xf32>
    %c0_70 = arith.constant 0 : index
    %c0_71 = arith.constant 0 : index
    %316 = vector.load %arg7[%c0_70, %c0_71] : memref<1x64xf32, #tpu.memory_space<vmem>>, vector<1x64xf32>
    %317 = vector.broadcast %316 : vector<1x64xf32> to vector<8x64xf32>
    %318 = arith.addf %315, %317 : vector<8x64xf32>
    %cst_72 = arith.constant 0.000000e+00 : f32
    %319 = vector.broadcast %cst_72 : f32 to vector<8x64xf32>
    %320 = arith.maximumf %318, %319 : vector<8x64xf32>
    %c0_73 = arith.constant 0 : index
    %c0_74 = arith.constant 0 : index
    %321 = vector.load %arg8[%c0_73, %c0_74] : memref<1x64xf32, #tpu.memory_space<vmem>>, vector<1x64xf32>
    %322 = vector.broadcast %321 : vector<1x64xf32> to vector<8x64xf32>
    %323 = arith.mulf %320, %322 : vector<8x64xf32>
    %cst_75 = arith.constant dense<0.000000e+00> : vector<8xf32>
    %324 = vector.multi_reduction <add>, %323, %cst_75 [1] : vector<8x64xf32> to vector<8xf32>
    %325 = vector.shape_cast %324 : vector<8xf32> to vector<8x1xf32>
    %c0_76 = arith.constant 0 : index
    %c0_77 = arith.constant 0 : index
    %326 = vector.load %arg9[%c0_76, %c0_77] : memref<1x1xf32, #tpu.memory_space<vmem>>, vector<1x1xf32>
    %327 = vector.broadcast %326 : vector<1x1xf32> to vector<8x1xf32>
    %328 = arith.addf %325, %327 : vector<8x1xf32>
    %329 = arith.negf %328 : vector<8x1xf32>
    %330 = math.exp %329 : vector<8x1xf32>
    %cst_78 = arith.constant 1.000000e+00 : f32
    %331 = vector.broadcast %cst_78 : f32 to vector<8x1xf32>
    %332 = arith.addf %331, %330 : vector<8x1xf32>
    %333 = arith.divf %331, %332 : vector<8x1xf32>
    %c0_79 = arith.constant 0 : index
    %c0_80 = arith.constant 0 : index
    %334 = vector.load %arg10[%c0_79, %c0_80] : memref<8x1xf32, #tpu.memory_space<vmem>>, vector<8x1xf32>
    tpu.vector_store %arg10[%c0_79, %c0_80], %333 {strides = array<i32>} : memref<8x1xf32, #tpu.memory_space<vmem>>, vector<8x1xf32>,
    return
  }
  func.func @transform_0(%arg0: i32) -> (i32, i32, i32) {
    %c0_i32 = arith.constant 0 : i32
    %c0_i32_0 = arith.constant 0 : i32
    %c0_i32_1 = arith.constant 0 : i32
    return %c0_i32, %arg0, %c0_i32_0 : i32, i32, i32
  }
  func.func @transform_1(%arg0: i32) -> (i32, i32) {
    %c0_i32 = arith.constant 0 : i32
    %c0_i32_0 = arith.constant 0 : i32
    %c0_i32_1 = arith.constant 0 : i32
    return %c0_i32, %c0_i32_0 : i32, i32
  }
  func.func @transform_2(%arg0: i32) -> (i32, i32) {
    %c0_i32 = arith.constant 0 : i32
    %c0_i32_0 = arith.constant 0 : i32
    %c0_i32_1 = arith.constant 0 : i32
    return %c0_i32, %c0_i32_0 : i32, i32
  }
  func.func @transform_3(%arg0: i32) -> (i32, i32) {
    %c0_i32 = arith.constant 0 : i32
    %c0_i32_0 = arith.constant 0 : i32
    %c0_i32_1 = arith.constant 0 : i32
    return %c0_i32, %c0_i32_0 : i32, i32
  }
  func.func @transform_4(%arg0: i32) -> (i32, i32) {
    %c0_i32 = arith.constant 0 : i32
    %c0_i32_0 = arith.constant 0 : i32
    %c0_i32_1 = arith.constant 0 : i32
    return %c0_i32, %c0_i32_0 : i32, i32
  }
  func.func @transform_5(%arg0: i32) -> (i32, i32) {
    %c0_i32 = arith.constant 0 : i32
    %c0_i32_0 = arith.constant 0 : i32
    %c0_i32_1 = arith.constant 0 : i32
    return %c0_i32, %c0_i32_0 : i32, i32
  }
  func.func @transform_6(%arg0: i32) -> (i32, i32) {
    %c0_i32 = arith.constant 0 : i32
    %c0_i32_0 = arith.constant 0 : i32
    %c0_i32_1 = arith.constant 0 : i32
    return %c0_i32, %c0_i32_0 : i32, i32
  }
  func.func @transform_7(%arg0: i32) -> (i32, i32) {
    %c0_i32 = arith.constant 0 : i32
    %c0_i32_0 = arith.constant 0 : i32
    %c0_i32_1 = arith.constant 0 : i32
    return %c0_i32, %c0_i32_0 : i32, i32
  }
  func.func @transform_8(%arg0: i32) -> (i32, i32) {
    %c0_i32 = arith.constant 0 : i32
    %c0_i32_0 = arith.constant 0 : i32
    %c0_i32_1 = arith.constant 0 : i32
    return %c0_i32, %c0_i32_0 : i32, i32
  }
  func.func @transform_9(%arg0: i32) -> (i32, i32) {
    %c0_i32 = arith.constant 0 : i32
    %c0_i32_0 = arith.constant 0 : i32
    return %arg0, %c0_i32 : i32, i32
  }
}

</mosaic_0001>

<llo_original>
// kernel: tpu_custom_call.1
$region0: #{tpu_custom_call.1}
  #allocation0 [shape = 'u32[]', space=smem, size = 0x4, offset = 0x4, fixed_abs, tag = 'smem constant byte address 0x4 - core index']
  #allocation1 [shape = 'u32[144,128]{1,0:T(1,128)}', space=vmem, size = 0x12000, scoped, tag = 'internal scratch']
  #allocation2 [shape = 'f32[1,1]{1,0:T(1,128)S(1)}', space=vmem, size = 0x200, scoped, tag = 'scoped memory for tpu_custom_call.1']
  %s0 = inlined_call_operand.hbm [shape: f32[8,8,128], index: 0, kind: input, shape index: {}]
  %s1 = inlined_call_operand.hbm [shape: f32[32,128], index: 1, kind: input, shape index: {}]
  %s2 = inlined_call_operand.hbm [shape: f32[32,128], index: 2, kind: input, shape index: {}]
  %s3 = inlined_call_operand.hbm [shape: f32[32,128], index: 3, kind: input, shape index: {}]
  %s4 = inlined_call_operand.vmem [shape: f32[1,128], index: 4, kind: input, shape index: {}]
  %s5 = inlined_call_operand.hbm [shape: f32[32,64], index: 5, kind: input, shape index: {}]
  %s6 = inlined_call_operand.vmem [shape: f32[1,64], index: 6, kind: input, shape index: {}]
  %s7 = inlined_call_operand.vmem [shape: f32[1,64], index: 7, kind: input, shape index: {}]
  %s8 = inlined_call_operand.<no memory space> [shape: f32[1,1], index: 8, kind: input, shape index: {}]
  %s9 = inlined_call_operand.vmem [shape: f32[8,1], index: 9, kind: output, shape index: {}]
  %s10 = sld [smem:[#allocation0]]
  $region66: #{tpu_custom_call.1} parent=0
    _
  %s12 = ssub.s32 1, %s10
  %s13 = scalar_select 0, %s12, %s10
  %v14 = vstv %s8
  %15 = vst [vmem:[#allocation2] sm:$0x1] %v14
  $region1: #{tpu_custom_call.1} parent=0
    #allocation3 [shape = 'u8[32768]{0}', space=vmem, size = 0x8000, scoped, tag = 'input window, operand 0, single buffered']
    #allocation4 [shape = 's32[1]{0}', space=sflag, size = 0x4, scoped, tag = 'scoped memory for tpu_custom_call.1']
    #allocation5 [shape = 'u8[16384]{0}', space=vmem, size = 0x4000, scoped, tag = 'input window, operand 1, single buffered']
    #allocation6 [shape = 's32[1]{0}', space=sflag, size = 0x4, scoped, tag = 'scoped memory for tpu_custom_call.1']
    #allocation7 [shape = 'u8[16384]{0}', space=vmem, size = 0x4000, scoped, tag = 'input window, operand 2, single buffered']
    #allocation8 [shape = 'u8[16384]{0}', space=vmem, size = 0x4000, scoped, tag = 'input window, operand 3, single buffered']
    #allocation9 [shape = 's32[1]{0}', space=sflag, size = 0x4, scoped, tag = 'scoped memory for tpu_custom_call.1']
    #allocation10 [shape = 'u8[16384]{0}', space=vmem, size = 0x4000, scoped, tag = 'input window, operand 5, single buffered']
    %16 = vsyncpa [#allocation4], 0
    %17 = vsyncpa [#allocation6], 0
    %18 = vsyncpa [#allocation9], 0
    // Predicated region
    $region2: #{tpu_custom_call.1} parent=1 // pred_check
      _
    $region3: #{tpu_custom_call.1} parent=1 // pred_check_branch
      %20 = sbr.rel (0) target = $region5
    $region4: #{tpu_custom_call.1} parent=1 // pred_region
      %s22 = ssub.s32 1024, 1024
      %23 = vsyncadd [#allocation4], %s22
      %s24 = sshll.u32 [#allocation3], 4
      %s25 = int_to_ptr.vmem [resolvable:$true] %s24
      %30 = dma.hbm_to_vmem [thread:$0]  %s0, 1024, %s25, [#allocation4], 128, 128, 8
    $region5: #{tpu_custom_call.1} parent=1 // pred_fallthru
      _
    // Predicated region
    $region6: #{tpu_custom_call.1} parent=1 // pred_check
      _
    $region7: #{tpu_custom_call.1} parent=1 // pred_check_branch
      %32 = sbr.rel (0) target = $region9
    $region8: #{tpu_custom_call.1} parent=1 // pred_region
      %s34 = ssub.s32 512, 512
      %35 = vsyncadd [#allocation6], %s34
      %s36 = sshll.u32 [#allocation5], 4
      %s37 = int_to_ptr.vmem [resolvable:$true] %s36
      %42 = dma.hbm_to_vmem [thread:$0]  %s1, 512, %s37, [#allocation6], 128, 128, 8
    $region9: #{tpu_custom_call.1} parent=1 // pred_fallthru
      _
    // Predicated region
    $region10: #{tpu_custom_call.1} parent=1 // pred_check
      _
    $region11: #{tpu_custom_call.1} parent=1 // pred_check_branch
      %44 = sbr.rel (0) target = $region13
    $region12: #{tpu_custom_call.1} parent=1 // pred_region
      %s46 = ssub.s32 512, 512
      %47 = vsyncadd [#allocation6], %s46
      %s48 = sshll.u32 [#allocation7], 4
      %s49 = int_to_ptr.vmem [resolvable:$true] %s48
      %54 = dma.hbm_to_vmem [thread:$0]  %s2, 512, %s49, [#allocation6], 128, 128, 8
    $region13: #{tpu_custom_call.1} parent=1 // pred_fallthru
      _
    // Predicated region
    $region14: #{tpu_custom_call.1} parent=1 // pred_check
      _
    $region15: #{tpu_custom_call.1} parent=1 // pred_check_branch
      %56 = sbr.rel (0) target = $region17
    $region16: #{tpu_custom_call.1} parent=1 // pred_region
      %s58 = ssub.s32 512, 512
      %59 = vsyncadd [#allocation9], %s58
      %s60 = sshll.u32 [#allocation8], 4
      %s61 = int_to_ptr.vmem [resolvable:$true] %s60
      %66 = dma.hbm_to_vmem [thread:$0]  %s3, 512, %s61, [#allocation9], 128, 128, 8
    $region17: #{tpu_custom_call.1} parent=1 // pred_fallthru
      _
    // Predicated region
    $region18: #{tpu_custom_call.1} parent=1 // pred_check
      _
    $region19: #{tpu_custom_call.1} parent=1 // pred_check_branch
      %68 = sbr.rel (0) target = $region21
    $region20: #{tpu_custom_call.1} parent=1 // pred_region
      _
    $region21: #{tpu_custom_call.1} parent=1 // pred_fallthru
      _
    // Predicated region
    $region22: #{tpu_custom_call.1} parent=1 // pred_check
      _
    $region23: #{tpu_custom_call.1} parent=1 // pred_check_branch
      %70 = sbr.rel (0) target = $region25
    $region24: #{tpu_custom_call.1} parent=1 // pred_region
      %s72 = ssub.s32 512, 512
      %73 = vsyncadd [#allocation9], %s72
      %s74 = sshll.u32 [#allocation10], 4
      %s75 = int_to_ptr.vmem [resolvable:$true] %s74
      %80 = dma.hbm_to_vmem [thread:$0]  %s5, 512, %s75, [#allocation9], 128, 128, 8
    $region25: #{tpu_custom_call.1} parent=1 // pred_fallthru
      _
    // Predicated region
    $region26: #{tpu_custom_call.1} parent=1 // pred_check
      _
    $region27: #{tpu_custom_call.1} parent=1 // pred_check_branch
      %82 = sbr.rel (0) target = $region29
    $region28: #{tpu_custom_call.1} parent=1 // pred_region
      _
    $region29: #{tpu_custom_call.1} parent=1 // pred_fallthru
      _
    // Predicated region
    $region30: #{tpu_custom_call.1} parent=1 // pred_check
      _
    $region31: #{tpu_custom_call.1} parent=1 // pred_check_branch
      %84 = sbr.rel (0) target = $region33
    $region32: #{tpu_custom_call.1} parent=1 // pred_region
      _
    $region33: #{tpu_custom_call.1} parent=1 // pred_fallthru
      _
    // Predicated region
    $region34: #{tpu_custom_call.1} parent=1 // pred_check
      _
    $region35: #{tpu_custom_call.1} parent=1 // pred_check_branch
      %86 = sbr.rel (0) target = $region37
    $region36: #{tpu_custom_call.1} parent=1 // pred_region
      _
    $region37: #{tpu_custom_call.1} parent=1 // pred_fallthru
      _
    // Predicated region
    $region38: #{tpu_custom_call.1} parent=1 // pred_check
      _
    $region39: #{tpu_custom_call.1} parent=1 // pred_check_branch
      %88 = sbr.rel (0) target = $region41
    $region40: #{tpu_custom_call.1} parent=1 // pred_region
      %89 = dma.done [#allocation4], 1024
    $region41: #{tpu_custom_call.1} parent=1 // pred_fallthru
      _
    // Predicated region
    $region42: #{tpu_custom_call.1} parent=1 // pred_check
      _
    $region43: #{tpu_custom_call.1} parent=1 // pred_check_branch
      %91 = sbr.rel (0) target = $region45
    $region44: #{tpu_custom_call.1} parent=1 // pred_region
      %92 = dma.done [#allocation6], 512
    $region45: #{tpu_custom_call.1} parent=1 // pred_fallthru
      _
    // Predicated region
    $region46: #{tpu_custom_call.1} parent=1 // pred_check
      _
    $region47: #{tpu_custom_call.1} parent=1 // pred_check_branch
      %94 = sbr.rel (0) target = $region49
    $region48: #{tpu_custom_call.1} parent=1 // pred_region
      %95 = dma.done [#allocation6], 512
    $region49: #{tpu_custom_call.1} parent=1 // pred_fallthru
      _
    // Predicated region
    $region50: #{tpu_custom_call.1} parent=1 // pred_check
      _
    $region51: #{tpu_custom_call.1} parent=1 // pred_check_branch
      %97 = sbr.rel (0) target = $region53
    $region52: #{tpu_custom_call.1} parent=1 // pred_region
      %98 = dma.done [#allocation9], 512
    $region53: #{tpu_custom_call.1} parent=1 // pred_fallthru
      _
    // Predicated region
    $region54: #{tpu_custom_call.1} parent=1 // pred_check
      _
    $region55: #{tpu_custom_call.1} parent=1 // pred_check_branch
      %100 = sbr.rel (0) target = $region57
    $region56: #{tpu_custom_call.1} parent=1 // pred_region
      %101 = dma.done [#allocation9], 512
    $region57: #{tpu_custom_call.1} parent=1 // pred_fallthru
      _
    %v102 = vld [vmem:[#allocation5] sm:$0xff]
    %v103 = vld [vmem:[#allocation5 + $0x8] sm:$0xff]
    %v104 = vld [vmem:[#allocation5 + $0x10] sm:$0xff]
    %v105 = vld [vmem:[#allocation5 + $0x18] sm:$0xff]
    %v106 = vld [vmem:[#allocation7] sm:$0xff]
    %v107 = vld [vmem:[#allocation7 + $0x8] sm:$0xff]
    %v108 = vld [vmem:[#allocation7 + $0x10] sm:$0xff]
    %v109 = vld [vmem:[#allocation7 + $0x18] sm:$0xff]
    %v110 = vld [vmem:[#allocation8] sm:$0xff]
    %v111 = vld [vmem:[#allocation8 + $0x8] sm:$0xff]
    %v112 = vld [vmem:[#allocation8 + $0x10] sm:$0xff]
    %v113 = vld [vmem:[#allocation8 + $0x18] sm:$0xff]
    %v114 = vld [vmem:[%s4] sm:$0x1]
    %v116 = vlaneseq
    %v117 = vshrl.u32 %v116, 7
    %v118 = vsub.s32 0, %v117
    %v119 = vrot.slane %v114, %v118
    %vm121 = vcmask 261120
    %v123 = vsel %vm121, 0.0, 0
    %125 = vmatprep.subr.mxu0 0.0
    %126 = vmatpush1.msra.mxu0 0.0
    %127 = vmatprep.subr.mxu0 0.0
    %128 = vmatpush1.msra.mxu0 0.0
    %129 = vmatprep.subr.mxu0 0.0
    %130 = vmatpush1.msra.mxu0 0.0
    %131 = vmatprep.subr.mxu0 0.0
    %132 = vmatpush1.msra.mxu0 0.0
    %133 = vmatprep.subr.mxu0 0.0
    %134 = vmatpush1.msra.mxu0 0.0
    %135 = vmatprep.subr.mxu0 0.0
    %136 = vmatpush1.msra.mxu0 0.0
    %137 = vmatprep.subr.mxu0 0.0
    %138 = vmatpush1.msra.mxu0 0.0
    %139 = vmatprep.subr.mxu0 0.0
    %140 = vmatpush1.msra.mxu0 0.0
    %141 = vmatprep.subr.mxu0 0.0
    %142 = vmatpush1.msra.mxu0 0.0
    %143 = vmatprep.subr.mxu0 0.0
    %144 = vmatpush1.msra.mxu0 0.0
    %145 = vmatprep.subr.mxu0 0.0
    %146 = vmatpush1.msra.mxu0 0.0
    %147 = vmatprep.subr.mxu0 0.0
    %148 = vmatpush1.msra.mxu0 0.0
    %149 = vmatprep.subr.mxu0 0.0
    %150 = vmatpush1.msra.mxu0 %v113
    %151 = vmatprep.subr.mxu0 0.0
    %152 = vmatpush1.msra.mxu0 %v112
    %153 = vmatprep.subr.mxu0 0.0
    %154 = vmatpush1.msra.mxu0 %v111
    %155 = vmatprep.subr.mxu0 0.0
    %156 = vmatpush1.msra.mxu0 %v110
    %157 = vmatprep.subr.mxu0 0.0
    %158 = vmatpush2.msra.mxu0 0.0
    %159 = vmatprep.subr.mxu0 0.0
    %160 = vmatpush2.msra.mxu0 0.0
    %161 = vmatprep.subr.mxu0 0.0
    %162 = vmatpush2.msra.mxu0 0.0
    %163 = vmatprep.subr.mxu0 0.0
    %164 = vmatpush2.msra.mxu0 0.0
    %165 = vmatprep.subr.mxu0 0.0
    %166 = vmatpush2.msra.mxu0 0.0
    %167 = vmatprep.subr.mxu0 0.0
    %168 = vmatpush2.msra.mxu0 0.0
    %169 = vmatprep.subr.mxu0 0.0
    %170 = vmatpush2.msra.mxu0 0.0
    %171 = vmatprep.subr.mxu0 0.0
    %172 = vmatpush2.msra.mxu0 0.0
    %173 = vmatprep.subr.mxu0 0.0
    %174 = vmatpush2.msra.mxu0 0.0
    %175 = vmatprep.subr.mxu0 0.0
    %176 = vmatpush2.msra.mxu0 0.0
    %177 = vmatprep.subr.mxu0 0.0
    %178 = vmatpush2.msra.mxu0 0.0
    %179 = vmatprep.subr.mxu0 0.0
    %180 = vmatpush2.msra.mxu0 0.0
    %181 = vmatprep.subr.mxu0 0.0
    %182 = vmatpush2.msra.mxu0 0.0
    %183 = vmatprep.subr.mxu0 0.0
    %184 = vmatpush2.msra.mxu0 0.0
    %185 = vmatprep.subr.mxu0 0.0
    %186 = vmatpush2.msra.mxu0 0.0
    %187 = vmatprep.subr.mxu0 0.0
    %188 = vmatpush2.msra.mxu0 0.0
    %189 = vmatprep.mubr.f32.mxu0 0.0
    %190 = vmatmul.mubr.f32.gmra.mxu0 %v123
    %v191 = vpop.f32.mrf.mxu0
    %v192 = vadd.f32 0.0, %v191
    %v193 = vpop.f32.mrf.mxu0
    %194 = vdwg.mxu0
    %v195 = vld [vmem:[#allocation3] sm:$0xff]
    %196 = vmatprep.subr.mxu0 0.0
    %197 = vmatpush1.msra.mxu0 0.0
    %198 = vmatprep.subr.mxu0 0.0
    %199 = vmatpush1.msra.mxu0 0.0
    %200 = vmatprep.subr.mxu0 0.0
    %201 = vmatpush1.msra.mxu0 0.0
    %202 = vmatprep.subr.mxu0 0.0
    %203 = vmatpush1.msra.mxu0 0.0
    %204 = vmatprep.subr.mxu0 0.0
    %205 = vmatpush1.msra.mxu0 0.0
    %206 = vmatprep.subr.mxu0 0.0
    %207 = vmatpush1.msra.mxu0 0.0
    %208 = vmatprep.subr.mxu0 0.0
    %209 = vmatpush1.msra.mxu0 0.0
    %210 = vmatprep.subr.mxu0 0.0
    %211 = vmatpush1.msra.mxu0 0.0
    %212 = vmatprep.subr.mxu0 0.0
    %213 = vmatpush1.msra.mxu0 0.0
    %214 = vmatprep.subr.mxu0 0.0
    %215 = vmatpush1.msra.mxu0 0.0
    %216 = vmatprep.subr.mxu0 0.0
    %217 = vmatpush1.msra.mxu0 0.0
    %218 = vmatprep.subr.mxu0 0.0
    %219 = vmatpush1.msra.mxu0 0.0
    %220 = vmatprep.subr.mxu0 0.0
    %221 = vmatpush1.msra.mxu0 %v105
    %222 = vmatprep.subr.mxu0 0.0
    %223 = vmatpush1.msra.mxu0 %v104
    %224 = vmatprep.subr.mxu0 0.0
    %225 = vmatpush1.msra.mxu0 %v103
    %226 = vmatprep.subr.mxu0 0.0
    %227 = vmatpush1.msra.mxu0 %v102
    %228 = vmatprep.subr.mxu0 0.0
    %229 = vmatpush2.msra.mxu0 0.0
    %230 = vmatprep.subr.mxu0 0.0
    %231 = vmatpush2.msra.mxu0 0.0
    %232 = vmatprep.subr.mxu0 0.0
    %233 = vmatpush2.msra.mxu0 0.0
    %234 = vmatprep.subr.mxu0 0.0
    %235 = vmatpush2.msra.mxu0 0.0
    %236 = vmatprep.subr.mxu0 0.0
    %237 = vmatpush2.msra.mxu0 0.0
    %238 = vmatprep.subr.mxu0 0.0
    %239 = vmatpush2.msra.mxu0 0.0
    %240 = vmatprep.subr.mxu0 0.0
    %241 = vmatpush2.msra.mxu0 0.0
    %242 = vmatprep.subr.mxu0 0.0
    %243 = vmatpush2.msra.mxu0 0.0
    %244 = vmatprep.subr.mxu0 0.0
    %245 = vmatpush2.msra.mxu0 0.0
    %246 = vmatprep.subr.mxu0 0.0
    %247 = vmatpush2.msra.mxu0 0.0
    %248 = vmatprep.subr.mxu0 0.0
    %249 = vmatpush2.msra.mxu0 0.0
    %250 = vmatprep.subr.mxu0 0.0
    %251 = vmatpush2.msra.mxu0 0.0
    %252 = vmatprep.subr.mxu0 0.0
    %253 = vmatpush2.msra.mxu0 0.0
    %254 = vmatprep.subr.mxu0 0.0
    %255 = vmatpush2.msra.mxu0 0.0
    %256 = vmatprep.subr.mxu0 0.0
    %257 = vmatpush2.msra.mxu0 0.0
    %258 = vmatprep.subr.mxu0 0.0
    %259 = vmatpush2.msra.mxu0 0.0
    %260 = vmatprep.mubr.f32.mxu0 0.0
    %261 = vmatmul.mubr.f32.gmra.mxu0 %v123
    %v262 = vpop.f32.mrf.mxu0
    %v263 = vadd.f32 0.0, %v262
    %v264 = vpop.f32.mrf.mxu0
    %265 = vdwg.mxu0
    %v266 = vadd.f32 %v195, %v263
    %v267 = vxor.u32 %v266, 2147483648
    %v268 = vmul.f32 %v267, 1.442695
    %v269 = vpow.pop %v268
    %v270 = vadd.f32 %v269, 1.0
    %v271 = vrcp.pop %v270
    %v272 = vmul.f32 1.0, %v271
    %v273 = vtanh.pop %v266
    %v274 = vmul.f32 %v272, 0.0
    %276 = vrot.lane.b32.xlu0 %v273, 64
    %v277 = vpop.permute.xlu0 %276
    %v279 = vmul.f32 %v272, %v277
    %281 = vrot.lane.b32.xlu0 %v279, 32
    %v282 = vpop.permute.xlu0 %281
    %v284 = vadd.f32 %v274, %v282
    %v285 = vtanh.pop %v284
    %287 = vrot.lane.b32.xlu0 %v285, 64
    %v288 = vpop.permute.xlu0 %287
    %v290 = vmul.f32 %v272, %v288
    %292 = vrot.lane.b32.xlu0 %v290, 32
    %v293 = vpop.permute.xlu0 %292
    %v294 = vsel %vm121, %v293, 0
    %296 = vmatprep.subr.mxu0 0.0
    %297 = vmatpush1.msra.mxu0 0.0
    %298 = vmatprep.subr.mxu0 0.0
    %299 = vmatpush1.msra.mxu0 0.0
    %300 = vmatprep.subr.mxu0 0.0
    %301 = vmatpush1.msra.mxu0 0.0
    %302 = vmatprep.subr.mxu0 0.0
    %303 = vmatpush1.msra.mxu0 0.0
    %304 = vmatprep.subr.mxu0 0.0
    %305 = vmatpush1.msra.mxu0 0.0
    %306 = vmatprep.subr.mxu0 0.0
    %307 = vmatpush1.msra.mxu0 0.0
    %308 = vmatprep.subr.mxu0 0.0
    %309 = vmatpush1.msra.mxu0 0.0
    %310 = vmatprep.subr.mxu0 0.0
    %311 = vmatpush1.msra.mxu0 0.0
    %312 = vmatprep.subr.mxu0 0.0
    %313 = vmatpush1.msra.mxu0 0.0
    %314 = vmatprep.subr.mxu0 0.0
    %315 = vmatpush1.msra.mxu0 0.0
    %316 = vmatprep.subr.mxu0 0.0
    %317 = vmatpush1.msra.mxu0 0.0
    %318 = vmatprep.subr.mxu0 0.0
    %319 = vmatpush1.msra.mxu0 0.0
    %320 = vmatprep.subr.mxu0 0.0
    %321 = vmatpush1.msra.mxu0 %v109
    %322 = vmatprep.subr.mxu0 0.0
    %323 = vmatpush1.msra.mxu0 %v108
    %324 = vmatprep.subr.mxu0 0.0
    %325 = vmatpush1.msra.mxu0 %v107
    %326 = vmatprep.subr.mxu0 0.0
    %327 = vmatpush1.msra.mxu0 %v106
    %328 = vmatprep.subr.mxu0 0.0
    %329 = vmatpush2.msra.mxu0 0.0
    %330 = vmatprep.subr.mxu0 0.0
    %331 = vmatpush2.msra.mxu0 0.0
    %332 = vmatprep.subr.mxu0 0.0
    %333 = vmatpush2.msra.mxu0 0.0
    %334 = vmatprep.subr.mxu0 0.0
    %335 = vmatpush2.msra.mxu0 0.0
    %336 = vmatprep.subr.mxu0 0.0
    %337 = vmatpush2.msra.mxu0 0.0
    %338 = vmatprep.subr.mxu0 0.0
    %339 = vmatpush2.msra.mxu0 0.0
    %340 = vmatprep.subr.mxu0 0.0
    %341 = vmatpush2.msra.mxu0 0.0
    %342 = vmatprep.subr.mxu0 0.0
    %343 = vmatpush2.msra.mxu0 0.0
    %344 = vmatprep.subr.mxu0 0.0
    %345 = vmatpush2.msra.mxu0 0.0
    %346 = vmatprep.subr.mxu0 0.0
    %347 = vmatpush2.msra.mxu0 0.0
    %348 = vmatprep.subr.mxu0 0.0
    %349 = vmatpush2.msra.mxu0 0.0
    %350 = vmatprep.subr.mxu0 0.0
    %351 = vmatpush2.msra.mxu0 0.0
    %352 = vmatprep.subr.mxu0 0.0
    %353 = vmatpush2.msra.mxu0 0.0
    %354 = vmatprep.subr.mxu0 0.0
    %355 = vmatpush2.msra.mxu0 0.0
    %356 = vmatprep.subr.mxu0 0.0
    %357 = vmatpush2.msra.mxu0 0.0
    %358 = vmatprep.subr.mxu0 0.0
    %359 = vmatpush2.msra.mxu0 0.0
    %360 = vmatprep.mubr.f32.mxu0 0.0
    %361 = vmatmul.mubr.f32.gmra.mxu0 %v294
    %v362 = vpop.f32.mrf.mxu0
    %v363 = vadd.f32 %v119, %v362
    %v364 = vpop.f32.mrf.mxu0
    %365 = vdwg.mxu0
    %v366 = vadd.f32 %v363, %v192
    %v367 = vxor.u32 %v366, 2147483648
    %v368 = vmul.f32 %v367, 1.442695
    %v369 = vpow.pop %v368
    %v370 = vadd.f32 %v369, 1.0
    %v371 = vrcp.pop %v370
    %v372 = vmul.f32 1.0, %v371
    %v373 = vtanh.pop %v366
    %v374 = vmul.f32 %v372, 0.0
    %376 = vrot.lane.b32.xlu0 %v373, 64
    %v377 = vpop.permute.xlu0 %376
    %v379 = vmul.f32 %v372, %v377
    %381 = vrot.lane.b32.xlu0 %v379, 32
    %v382 = vpop.permute.xlu0 %381
    %v384 = vadd.f32 %v374, %v382
    %v385 = vtanh.pop %v384
    %387 = vrot.lane.b32.xlu0 %v385, 64
    %v388 = vpop.permute.xlu0 %387
    %v390 = vmul.f32 %v372, %v388
    %392 = vrot.lane.b32.xlu0 %v390, 32
    %v393 = vpop.permute.xlu0 %392
    %v394 = vsel %vm121, %v393, 0
    %396 = vmatprep.subr.mxu0 0.0
    %397 = vmatpush1.msra.mxu0 0.0
    %398 = vmatprep.subr.mxu0 0.0
    %399 = vmatpush1.msra.mxu0 0.0
    %400 = vmatprep.subr.mxu0 0.0
    %401 = vmatpush1.msra.mxu0 0.0
    %402 = vmatprep.subr.mxu0 0.0
    %403 = vmatpush1.msra.mxu0 0.0
    %404 = vmatprep.subr.mxu0 0.0
    %405 = vmatpush1.msra.mxu0 0.0
    %406 = vmatprep.subr.mxu0 0.0
    %407 = vmatpush1.msra.mxu0 0.0
    %408 = vmatprep.subr.mxu0 0.0
    %409 = vmatpush1.msra.mxu0 0.0
    %410 = vmatprep.subr.mxu0 0.0
    %411 = vmatpush1.msra.mxu0 0.0
    %412 = vmatprep.subr.mxu0 0.0
    %413 = vmatpush1.msra.mxu0 0.0
    %414 = vmatprep.subr.mxu0 0.0
    %415 = vmatpush1.msra.mxu0 0.0
    %416 = vmatprep.subr.mxu0 0.0
    %417 = vmatpush1.msra.mxu0 0.0
    %418 = vmatprep.subr.mxu0 0.0
    %419 = vmatpush1.msra.mxu0 0.0
    %420 = vmatprep.subr.mxu0 0.0
    %421 = vmatpush1.msra.mxu0 %v113
    %422 = vmatprep.subr.mxu0 0.0
    %423 = vmatpush1.msra.mxu0 %v112
    %424 = vmatprep.subr.mxu0 0.0
    %425 = vmatpush1.msra.mxu0 %v111
    %426 = vmatprep.subr.mxu0 0.0
    %427 = vmatpush1.msra.mxu0 %v110
    %428 = vmatprep.subr.mxu0 0.0
    %429 = vmatpush2.msra.mxu0 0.0
    %430 = vmatprep.subr.mxu0 0.0
    %431 = vmatpush2.msra.mxu0 0.0
    %432 = vmatprep.subr.mxu0 0.0
    %433 = vmatpush2.msra.mxu0 0.0
    %434 = vmatprep.subr.mxu0 0.0
    %435 = vmatpush2.msra.mxu0 0.0
    %436 = vmatprep.subr.mxu0 0.0
    %437 = vmatpush2.msra.mxu0 0.0
    %438 = vmatprep.subr.mxu0 0.0
    %439 = vmatpush2.msra.mxu0 0.0
    %440 = vmatprep.subr.mxu0 0.0
    %441 = vmatpush2.msra.mxu0 0.0
    %442 = vmatprep.subr.mxu0 0.0
    %443 = vmatpush2.msra.mxu0 0.0
    %444 = vmatprep.subr.mxu0 0.0
    %445 = vmatpush2.msra.mxu0 0.0
    %446 = vmatprep.subr.mxu0 0.0
    %447 = vmatpush2.msra.mxu0 0.0
    %448 = vmatprep.subr.mxu0 0.0
    %449 = vmatpush2.msra.mxu0 0.0
    %450 = vmatprep.subr.mxu0 0.0
    %451 = vmatpush2.msra.mxu0 0.0
    %452 = vmatprep.subr.mxu0 0.0
    %453 = vmatpush2.msra.mxu0 0.0
    %454 = vmatprep.subr.mxu0 0.0
    %455 = vmatpush2.msra.mxu0 0.0
    %456 = vmatprep.subr.mxu0 0.0
    %457 = vmatpush2.msra.mxu0 0.0
    %458 = vmatprep.subr.mxu0 0.0
    %459 = vmatpush2.msra.mxu0 0.0
    %460 = vmatprep.mubr.f32.mxu0 0.0
    %461 = vmatmul.mubr.f32.gmra.mxu0 %v394
    %v462 = vpop.f32.mrf.mxu0
    %v463 = vadd.f32 0.0, %v462
    %v464 = vpop.f32.mrf.mxu0
    %465 = vdwg.mxu0
    %s466 = scalar_lea.vmem [#allocation3], 8
    %v467 = vld [vmem:[%s466] sm:$0xff]
    %468 = vmatprep.subr.mxu0 0.0
    %469 = vmatpush1.msra.mxu0 0.0
    %470 = vmatprep.subr.mxu0 0.0
    %471 = vmatpush1.msra.mxu0 0.0
    %472 = vmatprep.subr.mxu0 0.0
    %473 = vmatpush1.msra.mxu0 0.0
    %474 = vmatprep.subr.mxu0 0.0
    %475 = vmatpush1.msra.mxu0 0.0
    %476 = vmatprep.subr.mxu0 0.0
    %477 = vmatpush1.msra.mxu0 0.0
    %478 = vmatprep.subr.mxu0 0.0
    %479 = vmatpush1.msra.mxu0 0.0
    %480 = vmatprep.subr.mxu0 0.0
    %481 = vmatpush1.msra.mxu0 0.0
    %482 = vmatprep.subr.mxu0 0.0
    %483 = vmatpush1.msra.mxu0 0.0
    %484 = vmatprep.subr.mxu0 0.0
    %485 = vmatpush1.msra.mxu0 0.0
    %486 = vmatprep.subr.mxu0 0.0
    %487 = vmatpush1.msra.mxu0 0.0
    %488 = vmatprep.subr.mxu0 0.0
    %489 = vmatpush1.msra.mxu0 0.0
    %490 = vmatprep.subr.mxu0 0.0
    %491 = vmatpush1.msra.mxu0 0.0
    %492 = vmatprep.subr.mxu0 0.0
    %493 = vmatpush1.msra.mxu0 %v105
    %494 = vmatprep.subr.mxu0 0.0
    %495 = vmatpush1.msra.mxu0 %v104
    %496 = vmatprep.subr.mxu0 0.0
    %497 = vmatpush1.msra.mxu0 %v103
    %498 = vmatprep.subr.mxu0 0.0
    %499 = vmatpush1.msra.mxu0 %v102
    %500 = vmatprep.subr.mxu0 0.0
    %501 = vmatpush2.msra.mxu0 0.0
    %502 = vmatprep.subr.mxu0 0.0
    %503 = vmatpush2.msra.mxu0 0.0
    %504 = vmatprep.subr.mxu0 0.0
    %505 = vmatpush2.msra.mxu0 0.0
    %506 = vmatprep.subr.mxu0 0.0
    %507 = vmatpush2.msra.mxu0 0.0
    %508 = vmatprep.subr.mxu0 0.0
    %509 = vmatpush2.msra.mxu0 0.0
    %510 = vmatprep.subr.mxu0 0.0
    %511 = vmatpush2.msra.mxu0 0.0
    %512 = vmatprep.subr.mxu0 0.0
    %513 = vmatpush2.msra.mxu0 0.0
    %514 = vmatprep.subr.mxu0 0.0
    %515 = vmatpush2.msra.mxu0 0.0
    %516 = vmatprep.subr.mxu0 0.0
    %517 = vmatpush2.msra.mxu0 0.0
    %518 = vmatprep.subr.mxu0 0.0
    %519 = vmatpush2.msra.mxu0 0.0
    %520 = vmatprep.subr.mxu0 0.0
    %521 = vmatpush2.msra.mxu0 0.0
    %522 = vmatprep.subr.mxu0 0.0
    %523 = vmatpush2.msra.mxu0 0.0
    %524 = vmatprep.subr.mxu0 0.0
    %525 = vmatpush2.msra.mxu0 0.0
    %526 = vmatprep.subr.mxu0 0.0
    %527 = vmatpush2.msra.mxu0 0.0
    %528 = vmatprep.subr.mxu0 0.0
    %529 = vmatpush2.msra.mxu0 0.0
    %530 = vmatprep.subr.mxu0 0.0
    %531 = vmatpush2.msra.mxu0 0.0
    %532 = vmatprep.mubr.f32.mxu0 0.0
    %533 = vmatmul.mubr.f32.gmra.mxu0 %v294
    %v534 = vpop.f32.mrf.mxu0
    %v535 = vadd.f32 0.0, %v534
    %v536 = vpop.f32.mrf.mxu0
    %537 = vdwg.mxu0
    %v538 = vadd.f32 %v467, %v535
    %v539 = vxor.u32 %v538, 2147483648
    %v540 = vmul.f32 %v539, 1.442695
    %v541 = vpow.pop %v540
    %v542 = vadd.f32 %v541, 1.0
    %v543 = vrcp.pop %v542
    %v544 = vmul.f32 1.0, %v543
    %v545 = vtanh.pop %v538
    %v546 = vmul.f32 %v544, %v284
    %548 = vrot.lane.b32.xlu0 %v545, 64
    %v549 = vpop.permute.xlu0 %548
    %v551 = vmul.f32 %v544, %v549
    %553 = vrot.lane.b32.xlu0 %v551, 32
    %v554 = vpop.permute.xlu0 %553
    %v556 = vadd.f32 %v546, %v554
    %v557 = vtanh.pop %v556
    %559 = vrot.lane.b32.xlu0 %v557, 64
    %v560 = vpop.permute.xlu0 %559
    %v562 = vmul.f32 %v544, %v560
    %564 = vrot.lane.b32.xlu0 %v562, 32
    %v565 = vpop.permute.xlu0 %564
    %v566 = vsel %vm121, %v565, 0
    %568 = vmatprep.subr.mxu0 0.0
    %569 = vmatpush1.msra.mxu0 0.0
    %570 = vmatprep.subr.mxu0 0.0
    %571 = vmatpush1.msra.mxu0 0.0
    %572 = vmatprep.subr.mxu0 0.0
    %573 = vmatpush1.msra.mxu0 0.0
    %574 = vmatprep.subr.mxu0 0.0
    %575 = vmatpush1.msra.mxu0 0.0
    %576 = vmatprep.subr.mxu0 0.0
    %577 = vmatpush1.msra.mxu0 0.0
    %578 = vmatprep.subr.mxu0 0.0
    %579 = vmatpush1.msra.mxu0 0.0
    %580 = vmatprep.subr.mxu0 0.0
    %581 = vmatpush1.msra.mxu0 0.0
    %582 = vmatprep.subr.mxu0 0.0
    %583 = vmatpush1.msra.mxu0 0.0
    %584 = vmatprep.subr.mxu0 0.0
    %585 = vmatpush1.msra.mxu0 0.0
    %586 = vmatprep.subr.mxu0 0.0
    %587 = vmatpush1.msra.mxu0 0.0
    %588 = vmatprep.subr.mxu0 0.0
    %589 = vmatpush1.msra.mxu0 0.0
    %590 = vmatprep.subr.mxu0 0.0
    %591 = vmatpush1.msra.mxu0 0.0
    %592 = vmatprep.subr.mxu0 0.0
    %593 = vmatpush1.msra.mxu0 %v109
    %594 = vmatprep.subr.mxu0 0.0
    %595 = vmatpush1.msra.mxu0 %v108
    %596 = vmatprep.subr.mxu0 0.0
    %597 = vmatpush1.msra.mxu0 %v107
    %598 = vmatprep.subr.mxu0 0.0
    %599 = vmatpush1.msra.mxu0 %v106
    %600 = vmatprep.subr.mxu0 0.0
    %601 = vmatpush2.msra.mxu0 0.0
    %602 = vmatprep.subr.mxu0 0.0
    %603 = vmatpush2.msra.mxu0 0.0
    %604 = vmatprep.subr.mxu0 0.0
    %605 = vmatpush2.msra.mxu0 0.0
    %606 = vmatprep.subr.mxu0 0.0
    %607 = vmatpush2.msra.mxu0 0.0
    %608 = vmatprep.subr.mxu0 0.0
    %609 = vmatpush2.msra.mxu0 0.0
    %610 = vmatprep.subr.mxu0 0.0
    %611 = vmatpush2.msra.mxu0 0.0
    %612 = vmatprep.subr.mxu0 0.0
    %613 = vmatpush2.msra.mxu0 0.0
    %614 = vmatprep.subr.mxu0 0.0
    %615 = vmatpush2.msra.mxu0 0.0
    %616 = vmatprep.subr.mxu0 0.0
    %617 = vmatpush2.msra.mxu0 0.0
    %618 = vmatprep.subr.mxu0 0.0
    %619 = vmatpush2.msra.mxu0 0.0
    %620 = vmatprep.subr.mxu0 0.0
    %621 = vmatpush2.msra.mxu0 0.0
    %622 = vmatprep.subr.mxu0 0.0
    %623 = vmatpush2.msra.mxu0 0.0
    %624 = vmatprep.subr.mxu0 0.0
    %625 = vmatpush2.msra.mxu0 0.0
    %626 = vmatprep.subr.mxu0 0.0
    %627 = vmatpush2.msra.mxu0 0.0
    %628 = vmatprep.subr.mxu0 0.0
    %629 = vmatpush2.msra.mxu0 0.0
    %630 = vmatprep.subr.mxu0 0.0
    %631 = vmatpush2.msra.mxu0 0.0
    %632 = vmatprep.mubr.f32.mxu0 0.0
    %633 = vmatmul.mubr.f32.gmra.mxu0 %v566
    %v634 = vpop.f32.mrf.mxu0
    %v635 = vadd.f32 %v119, %v634
    %v636 = vpop.f32.mrf.mxu0
    %637 = vdwg.mxu0
    %v638 = vadd.f32 %v635, %v463
    %v639 = vxor.u32 %v638, 2147483648
    %v640 = vmul.f32 %v639, 1.442695
    %v641 = vpow.pop %v640
    %v642 = vadd.f32 %v641, 1.0
    %v643 = vrcp.pop %v642
    %v644 = vmul.f32 1.0, %v643
    %v645 = vtanh.pop %v638
    %v646 = vmul.f32 %v644, %v384
    %648 = vrot.lane.b32.xlu0 %v645, 64
    %v649 = vpop.permute.xlu0 %648
    %v651 = vmul.f32 %v644, %v649
    %653 = vrot.lane.b32.xlu0 %v651, 32
    %v654 = vpop.permute.xlu0 %653
    %v656 = vadd.f32 %v646, %v654
    %v657 = vtanh.pop %v656
    %659 = vrot.lane.b32.xlu0 %v657, 64
    %v660 = vpop.permute.xlu0 %659
    %v662 = vmul.f32 %v644, %v660
    %664 = vrot.lane.b32.xlu0 %v662, 32
    %v665 = vpop.permute.xlu0 %664
    %v666 = vsel %vm121, %v665, 0
    %668 = vmatprep.subr.mxu0 0.0
    %669 = vmatpush1.msra.mxu0 0.0
    %670 = vmatprep.subr.mxu0 0.0
    %671 = vmatpush1.msra.mxu0 0.0
    %672 = vmatprep.subr.mxu0 0.0
    %673 = vmatpush1.msra.mxu0 0.0
    %674 = vmatprep.subr.mxu0 0.0
    %675 = vmatpush1.msra.mxu0 0.0
    %676 = vmatprep.subr.mxu0 0.0
    %677 = vmatpush1.msra.mxu0 0.0
    %678 = vmatprep.subr.mxu0 0.0
    %679 = vmatpush1.msra.mxu0 0.0
    %680 = vmatprep.subr.mxu0 0.0
    %681 = vmatpush1.msra.mxu0 0.0
    %682 = vmatprep.subr.mxu0 0.0
    %683 = vmatpush1.msra.mxu0 0.0
    %684 = vmatprep.subr.mxu0 0.0
    %685 = vmatpush1.msra.mxu0 0.0
    %686 = vmatprep.subr.mxu0 0.0
    %687 = vmatpush1.msra.mxu0 0.0
    %688 = vmatprep.subr.mxu0 0.0
    %689 = vmatpush1.msra.mxu0 0.0
    %690 = vmatprep.subr.mxu0 0.0
    %691 = vmatpush1.msra.mxu0 0.0
    %692 = vmatprep.subr.mxu0 0.0
    %693 = vmatpush1.msra.mxu0 %v113
    %694 = vmatprep.subr.mxu0 0.0
    %695 = vmatpush1.msra.mxu0 %v112
    %696 = vmatprep.subr.mxu0 0.0
    %697 = vmatpush1.msra.mxu0 %v111
    %698 = vmatprep.subr.mxu0 0.0
    %699 = vmatpush1.msra.mxu0 %v110
    %700 = vmatprep.subr.mxu0 0.0
    %701 = vmatpush2.msra.mxu0 0.0
    %702 = vmatprep.subr.mxu0 0.0
    %703 = vmatpush2.msra.mxu0 0.0
    %704 = vmatprep.subr.mxu0 0.0
    %705 = vmatpush2.msra.mxu0 0.0
    %706 = vmatprep.subr.mxu0 0.0
    %707 = vmatpush2.msra.mxu0 0.0
    %708 = vmatprep.subr.mxu0 0.0
    %709 = vmatpush2.msra.mxu0 0.0
    %710 = vmatprep.subr.mxu0 0.0
    %711 = vmatpush2.msra.mxu0 0.0
    %712 = vmatprep.subr.mxu0 0.0
    %713 = vmatpush2.msra.mxu0 0.0
    %714 = vmatprep.subr.mxu0 0.0
    %715 = vmatpush2.msra.mxu0 0.0
    %716 = vmatprep.subr.mxu0 0.0
    %717 = vmatpush2.msra.mxu0 0.0
    %718 = vmatprep.subr.mxu0 0.0
    %719 = vmatpush2.msra.mxu0 0.0
    %720 = vmatprep.subr.mxu0 0.0
    %721 = vmatpush2.msra.mxu0 0.0
    %722 = vmatprep.subr.mxu0 0.0
    %723 = vmatpush2.msra.mxu0 0.0
    %724 = vmatprep.subr.mxu0 0.0
    %725 = vmatpush2.msra.mxu0 0.0
    %726 = vmatprep.subr.mxu0 0.0
    %727 = vmatpush2.msra.mxu0 0.0
    %728 = vmatprep.subr.mxu0 0.0
    %729 = vmatpush2.msra.mxu0 0.0
    %730 = vmatprep.subr.mxu0 0.0
    %731 = vmatpush2.msra.mxu0 0.0
    %732 = vmatprep.mubr.f32.mxu0 0.0
    %733 = vmatmul.mubr.f32.gmra.mxu0 %v666
    %v734 = vpop.f32.mrf.mxu0
    %v735 = vadd.f32 0.0, %v734
    %v736 = vpop.f32.mrf.mxu0
    %737 = vdwg.mxu0
    %s738 = scalar_lea.vmem [#allocation3], 16
    %v739 = vld [vmem:[%s738] sm:$0xff]
    %740 = vmatprep.subr.mxu0 0.0
    %741 = vmatpush1.msra.mxu0 0.0
    %742 = vmatprep.subr.mxu0 0.0
    %743 = vmatpush1.msra.mxu0 0.0
    %744 = vmatprep.subr.mxu0 0.0
    %745 = vmatpush1.msra.mxu0 0.0
    %746 = vmatprep.subr.mxu0 0.0
    %747 = vmatpush1.msra.mxu0 0.0
    %748 = vmatprep.subr.mxu0 0.0
    %749 = vmatpush1.msra.mxu0 0.0
    %750 = vmatprep.subr.mxu0 0.0
    %751 = vmatpush1.msra.mxu0 0.0
    %752 = vmatprep.subr.mxu0 0.0
    %753 = vmatpush1.msra.mxu0 0.0
    %754 = vmatprep.subr.mxu0 0.0
    %755 = vmatpush1.msra.mxu0 0.0
    %756 = vmatprep.subr.mxu0 0.0
    %757 = vmatpush1.msra.mxu0 0.0
    %758 = vmatprep.subr.mxu0 0.0
    %759 = vmatpush1.msra.mxu0 0.0
    %760 = vmatprep.subr.mxu0 0.0
    %761 = vmatpush1.msra.mxu0 0.0
    %762 = vmatprep.subr.mxu0 0.0
    %763 = vmatpush1.msra.mxu0 0.0
    %764 = vmatprep.subr.mxu0 0.0
    %765 = vmatpush1.msra.mxu0 %v105
    %766 = vmatprep.subr.mxu0 0.0
    %767 = vmatpush1.msra.mxu0 %v104
    %768 = vmatprep.subr.mxu0 0.0
    %769 = vmatpush1.msra.mxu0 %v103
    %770 = vmatprep.subr.mxu0 0.0
    %771 = vmatpush1.msra.mxu0 %v102
    %772 = vmatprep.subr.mxu0 0.0
    %773 = vmatpush2.msra.mxu0 0.0
    %774 = vmatprep.subr.mxu0 0.0
    %775 = vmatpush2.msra.mxu0 0.0
    %776 = vmatprep.subr.mxu0 0.0
    %777 = vmatpush2.msra.mxu0 0.0
    %778 = vmatprep.subr.mxu0 0.0
    %779 = vmatpush2.msra.mxu0 0.0
    %780 = vmatprep.subr.mxu0 0.0
    %781 = vmatpush2.msra.mxu0 0.0
    %782 = vmatprep.subr.mxu0 0.0
    %783 = vmatpush2.msra.mxu0 0.0
    %784 = vmatprep.subr.mxu0 0.0
    %785 = vmatpush2.msra.mxu0 0.0
    %786 = vmatprep.subr.mxu0 0.0
    %787 = vmatpush2.msra.mxu0 0.0
    %788 = vmatprep.subr.mxu0 0.0
    %789 = vmatpush2.msra.mxu0 0.0
    %790 = vmatprep.subr.mxu0 0.0
    %791 = vmatpush2.msra.mxu0 0.0
    %792 = vmatprep.subr.mxu0 0.0
    %793 = vmatpush2.msra.mxu0 0.0
    %794 = vmatprep.subr.mxu0 0.0
    %795 = vmatpush2.msra.mxu0 0.0
    %796 = vmatprep.subr.mxu0 0.0
    %797 = vmatpush2.msra.mxu0 0.0
    %798 = vmatprep.subr.mxu0 0.0
    %799 = vmatpush2.msra.mxu0 0.0
    %800 = vmatprep.subr.mxu0 0.0
    %801 = vmatpush2.msra.mxu0 0.0
    %802 = vmatprep.subr.mxu0 0.0
    %803 = vmatpush2.msra.mxu0 0.0
    %804 = vmatprep.mubr.f32.mxu0 0.0
    %805 = vmatmul.mubr.f32.gmra.mxu0 %v566
    %v806 = vpop.f32.mrf.mxu0
    %v807 = vadd.f32 0.0, %v806
    %v808 = vpop.f32.mrf.mxu0
    %809 = vdwg.mxu0
    %v810 = vadd.f32 %v739, %v807
    %v811 = vxor.u32 %v810, 2147483648
    %v812 = vmul.f32 %v811, 1.442695
    %v813 = vpow.pop %v812
    %v814 = vadd.f32 %v813, 1.0
    %v815 = vrcp.pop %v814
    %v816 = vmul.f32 1.0, %v815
    %v817 = vtanh.pop %v810
    %v818 = vmul.f32 %v816, %v556
    %820 = vrot.lane.b32.xlu0 %v817, 64
    %v821 = vpop.permute.xlu0 %820
    %v823 = vmul.f32 %v816, %v821
    %825 = vrot.lane.b32.xlu0 %v823, 32
    %v826 = vpop.permute.xlu0 %825
    %v828 = vadd.f32 %v818, %v826
    %v829 = vtanh.pop %v828
    %831 = vrot.lane.b32.xlu0 %v829, 64
    %v832 = vpop.permute.xlu0 %831
    %v834 = vmul.f32 %v816, %v832
    %836 = vrot.lane.b32.xlu0 %v834, 32
    %v837 = vpop.permute.xlu0 %836
    %v838 = vsel %vm121, %v837, 0
    %840 = vmatprep.subr.mxu0 0.0
    %841 = vmatpush1.msra.mxu0 0.0
    %842 = vmatprep.subr.mxu0 0.0
    %843 = vmatpush1.msra.mxu0 0.0
    %844 = vmatprep.subr.mxu0 0.0
    %845 = vmatpush1.msra.mxu0 0.0
    %846 = vmatprep.subr.mxu0 0.0
    %847 = vmatpush1.msra.mxu0 0.0
    %848 = vmatprep.subr.mxu0 0.0
    %849 = vmatpush1.msra.mxu0 0.0
    %850 = vmatprep.subr.mxu0 0.0
    %851 = vmatpush1.msra.mxu0 0.0
    %852 = vmatprep.subr.mxu0 0.0
    %853 = vmatpush1.msra.mxu0 0.0
    %854 = vmatprep.subr.mxu0 0.0
    %855 = vmatpush1.msra.mxu0 0.0
    %856 = vmatprep.subr.mxu0 0.0
    %857 = vmatpush1.msra.mxu0 0.0
    %858 = vmatprep.subr.mxu0 0.0
    %859 = vmatpush1.msra.mxu0 0.0
    %860 = vmatprep.subr.mxu0 0.0
    %861 = vmatpush1.msra.mxu0 0.0
    %862 = vmatprep.subr.mxu0 0.0
    %863 = vmatpush1.msra.mxu0 0.0
    %864 = vmatprep.subr.mxu0 0.0
    %865 = vmatpush1.msra.mxu0 %v109
    %866 = vmatprep.subr.mxu0 0.0
    %867 = vmatpush1.msra.mxu0 %v108
    %868 = vmatprep.subr.mxu0 0.0
    %869 = vmatpush1.msra.mxu0 %v107
    %870 = vmatprep.subr.mxu0 0.0
    %871 = vmatpush1.msra.mxu0 %v106
    %872 = vmatprep.subr.mxu0 0.0
    %873 = vmatpush2.msra.mxu0 0.0
    %874 = vmatprep.subr.mxu0 0.0
    %875 = vmatpush2.msra.mxu0 0.0
    %876 = vmatprep.subr.mxu0 0.0
    %877 = vmatpush2.msra.mxu0 0.0
    %878 = vmatprep.subr.mxu0 0.0
    %879 = vmatpush2.msra.mxu0 0.0
    %880 = vmatprep.subr.mxu0 0.0
    %881 = vmatpush2.msra.mxu0 0.0
    %882 = vmatprep.subr.mxu0 0.0
    %883 = vmatpush2.msra.mxu0 0.0
    %884 = vmatprep.subr.mxu0 0.0
    %885 = vmatpush2.msra.mxu0 0.0
    %886 = vmatprep.subr.mxu0 0.0
    %887 = vmatpush2.msra.mxu0 0.0
    %888 = vmatprep.subr.mxu0 0.0
    %889 = vmatpush2.msra.mxu0 0.0
    %890 = vmatprep.subr.mxu0 0.0
    %891 = vmatpush2.msra.mxu0 0.0
    %892 = vmatprep.subr.mxu0 0.0
    %893 = vmatpush2.msra.mxu0 0.0
    %894 = vmatprep.subr.mxu0 0.0
    %895 = vmatpush2.msra.mxu0 0.0
    %896 = vmatprep.subr.mxu0 0.0
    %897 = vmatpush2.msra.mxu0 0.0
    %898 = vmatprep.subr.mxu0 0.0
    %899 = vmatpush2.msra.mxu0 0.0
    %900 = vmatprep.subr.mxu0 0.0
    %901 = vmatpush2.msra.mxu0 0.0
    %902 = vmatprep.subr.mxu0 0.0
    %903 = vmatpush2.msra.mxu0 0.0
    %904 = vmatprep.mubr.f32.mxu0 0.0
    %905 = vmatmul.mubr.f32.gmra.mxu0 %v838
    %v906 = vpop.f32.mrf.mxu0
    %v907 = vadd.f32 %v119, %v906
    %v908 = vpop.f32.mrf.mxu0
    %909 = vdwg.mxu0
    %v910 = vadd.f32 %v907, %v735
    %v911 = vxor.u32 %v910, 2147483648
    %v912 = vmul.f32 %v911, 1.442695
    %v913 = vpow.pop %v912
    %v914 = vadd.f32 %v913, 1.0
    %v915 = vrcp.pop %v914
    %v916 = vmul.f32 1.0, %v915
    %v917 = vtanh.pop %v910
    %v918 = vmul.f32 %v916, %v656
    %920 = vrot.lane.b32.xlu0 %v917, 64
    %v921 = vpop.permute.xlu0 %920
    %v923 = vmul.f32 %v916, %v921
    %925 = vrot.lane.b32.xlu0 %v923, 32
    %v926 = vpop.permute.xlu0 %925
    %v928 = vadd.f32 %v918, %v926
    %v929 = vtanh.pop %v928
    %931 = vrot.lane.b32.xlu0 %v929, 64
    %v932 = vpop.permute.xlu0 %931
    %v934 = vmul.f32 %v916, %v932
    %936 = vrot.lane.b32.xlu0 %v934, 32
    %v937 = vpop.permute.xlu0 %936
    %v938 = vsel %vm121, %v937, 0
    %940 = vmatprep.subr.mxu0 0.0
    %941 = vmatpush1.msra.mxu0 0.0
    %942 = vmatprep.subr.mxu0 0.0
    %943 = vmatpush1.msra.mxu0 0.0
    %944 = vmatprep.subr.mxu0 0.0
    %945 = vmatpush1.msra.mxu0 0.0
    %946 = vmatprep.subr.mxu0 0.0
    %947 = vmatpush1.msra.mxu0 0.0
    %948 = vmatprep.subr.mxu0 0.0
    %949 = vmatpush1.msra.mxu0 0.0
    %950 = vmatprep.subr.mxu0 0.0
    %951 = vmatpush1.msra.mxu0 0.0
    %952 = vmatprep.subr.mxu0 0.0
    %953 = vmatpush1.msra.mxu0 0.0
    %954 = vmatprep.subr.mxu0 0.0
    %955 = vmatpush1.msra.mxu0 0.0
    %956 = vmatprep.subr.mxu0 0.0
    %957 = vmatpush1.msra.mxu0 0.0
    %958 = vmatprep.subr.mxu0 0.0
    %959 = vmatpush1.msra.mxu0 0.0
    %960 = vmatprep.subr.mxu0 0.0
    %961 = vmatpush1.msra.mxu0 0.0
    %962 = vmatprep.subr.mxu0 0.0
    %963 = vmatpush1.msra.mxu0 0.0
    %964 = vmatprep.subr.mxu0 0.0
    %965 = vmatpush1.msra.mxu0 %v113
    %966 = vmatprep.subr.mxu0 0.0
    %967 = vmatpush1.msra.mxu0 %v112
    %968 = vmatprep.subr.mxu0 0.0
    %969 = vmatpush1.msra.mxu0 %v111
    %970 = vmatprep.subr.mxu0 0.0
    %971 = vmatpush1.msra.mxu0 %v110
    %972 = vmatprep.subr.mxu0 0.0
    %973 = vmatpush2.msra.mxu0 0.0
    %974 = vmatprep.subr.mxu0 0.0
    %975 = vmatpush2.msra.mxu0 0.0
    %976 = vmatprep.subr.mxu0 0.0
    %977 = vmatpush2.msra.mxu0 0.0
    %978 = vmatprep.subr.mxu0 0.0
    %979 = vmatpush2.msra.mxu0 0.0
    %980 = vmatprep.subr.mxu0 0.0
    %981 = vmatpush2.msra.mxu0 0.0
    %982 = vmatprep.subr.mxu0 0.0
    %983 = vmatpush2.msra.mxu0 0.0
    %984 = vmatprep.subr.mxu0 0.0
    %985 = vmatpush2.msra.mxu0 0.0
    %986 = vmatprep.subr.mxu0 0.0
    %987 = vmatpush2.msra.mxu0 0.0
    %988 = vmatprep.subr.mxu0 0.0
    %989 = vmatpush2.msra.mxu0 0.0
    %990 = vmatprep.subr.mxu0 0.0
    %991 = vmatpush2.msra.mxu0 0.0
    %992 = vmatprep.subr.mxu0 0.0
    %993 = vmatpush2.msra.mxu0 0.0
    %994 = vmatprep.subr.mxu0 0.0
    %995 = vmatpush2.msra.mxu0 0.0
    %996 = vmatprep.subr.mxu0 0.0
    %997 = vmatpush2.msra.mxu0 0.0
    %998 = vmatprep.subr.mxu0 0.0
    %999 = vmatpush2.msra.mxu0 0.0
    %1000 = vmatprep.subr.mxu0 0.0
    %1001 = vmatpush2.msra.mxu0 0.0
    %1002 = vmatprep.subr.mxu0 0.0
    %1003 = vmatpush2.msra.mxu0 0.0
    %1004 = vmatprep.mubr.f32.mxu0 0.0
    %1005 = vmatmul.mubr.f32.gmra.mxu0 %v938
    %v1006 = vpop.f32.mrf.mxu0
    %v1007 = vadd.f32 0.0, %v1006
    %v1008 = vpop.f32.mrf.mxu0
    %1009 = vdwg.mxu0
    %s1010 = scalar_lea.vmem [#allocation3], 24
    %v1011 = vld [vmem:[%s1010] sm:$0xff]
    %1012 = vmatprep.subr.mxu0 0.0
    %1013 = vmatpush1.msra.mxu0 0.0
    %1014 = vmatprep.subr.mxu0 0.0
    %1015 = vmatpush1.msra.mxu0 0.0
    %1016 = vmatprep.subr.mxu0 0.0
    %1017 = vmatpush1.msra.mxu0 0.0
    %1018 = vmatprep.subr.mxu0 0.0
    %1019 = vmatpush1.msra.mxu0 0.0
    %1020 = vmatprep.subr.mxu0 0.0
    %1021 = vmatpush1.msra.mxu0 0.0
    %1022 = vmatprep.subr.mxu0 0.0
    %1023 = vmatpush1.msra.mxu0 0.0
    %1024 = vmatprep.subr.mxu0 0.0
    %1025 = vmatpush1.msra.mxu0 0.0
    %1026 = vmatprep.subr.mxu0 0.0
    %1027 = vmatpush1.msra.mxu0 0.0
    %1028 = vmatprep.subr.mxu0 0.0
    %1029 = vmatpush1.msra.mxu0 0.0
    %1030 = vmatprep.subr.mxu0 0.0
    %1031 = vmatpush1.msra.mxu0 0.0
    %1032 = vmatprep.subr.mxu0 0.0
    %1033 = vmatpush1.msra.mxu0 0.0
    %1034 = vmatprep.subr.mxu0 0.0
    %1035 = vmatpush1.msra.mxu0 0.0
    %1036 = vmatprep.subr.mxu0 0.0
    %1037 = vmatpush1.msra.mxu0 %v105
    %1038 = vmatprep.subr.mxu0 0.0
    %1039 = vmatpush1.msra.mxu0 %v104
    %1040 = vmatprep.subr.mxu0 0.0
    %1041 = vmatpush1.msra.mxu0 %v103
    %1042 = vmatprep.subr.mxu0 0.0
    %1043 = vmatpush1.msra.mxu0 %v102
    %1044 = vmatprep.subr.mxu0 0.0
    %1045 = vmatpush2.msra.mxu0 0.0
    %1046 = vmatprep.subr.mxu0 0.0
    %1047 = vmatpush2.msra.mxu0 0.0
    %1048 = vmatprep.subr.mxu0 0.0
    %1049 = vmatpush2.msra.mxu0 0.0
    %1050 = vmatprep.subr.mxu0 0.0
    %1051 = vmatpush2.msra.mxu0 0.0
    %1052 = vmatprep.subr.mxu0 0.0
    %1053 = vmatpush2.msra.mxu0 0.0
    %1054 = vmatprep.subr.mxu0 0.0
    %1055 = vmatpush2.msra.mxu0 0.0
    %1056 = vmatprep.subr.mxu0 0.0
    %1057 = vmatpush2.msra.mxu0 0.0
    %1058 = vmatprep.subr.mxu0 0.0
    %1059 = vmatpush2.msra.mxu0 0.0
    %1060 = vmatprep.subr.mxu0 0.0
    %1061 = vmatpush2.msra.mxu0 0.0
    %1062 = vmatprep.subr.mxu0 0.0
    %1063 = vmatpush2.msra.mxu0 0.0
    %1064 = vmatprep.subr.mxu0 0.0
    %1065 = vmatpush2.msra.mxu0 0.0
    %1066 = vmatprep.subr.mxu0 0.0
    %1067 = vmatpush2.msra.mxu0 0.0
    %1068 = vmatprep.subr.mxu0 0.0
    %1069 = vmatpush2.msra.mxu0 0.0
    %1070 = vmatprep.subr.mxu0 0.0
    %1071 = vmatpush2.msra.mxu0 0.0
    %1072 = vmatprep.subr.mxu0 0.0
    %1073 = vmatpush2.msra.mxu0 0.0
    %1074 = vmatprep.subr.mxu0 0.0
    %1075 = vmatpush2.msra.mxu0 0.0
    %1076 = vmatprep.mubr.f32.mxu0 0.0
    %1077 = vmatmul.mubr.f32.gmra.mxu0 %v838
    %v1078 = vpop.f32.mrf.mxu0
    %v1079 = vadd.f32 0.0, %v1078
    %v1080 = vpop.f32.mrf.mxu0
    %1081 = vdwg.mxu0
    %v1082 = vadd.f32 %v1011, %v1079
    %v1083 = vxor.u32 %v1082, 2147483648
    %v1084 = vmul.f32 %v1083, 1.442695
    %v1085 = vpow.pop %v1084
    %v1086 = vadd.f32 %v1085, 1.0
    %v1087 = vrcp.pop %v1086
    %v1088 = vmul.f32 1.0, %v1087
    %v1089 = vtanh.pop %v1082
    %v1090 = vmul.f32 %v1088, %v828
    %1092 = vrot.lane.b32.xlu0 %v1089, 64
    %v1093 = vpop.permute.xlu0 %1092
    %v1095 = vmul.f32 %v1088, %v1093
    %1097 = vrot.lane.b32.xlu0 %v1095, 32
    %v1098 = vpop.permute.xlu0 %1097
    %v1100 = vadd.f32 %v1090, %v1098
    %v1101 = vtanh.pop %v1100
    %1103 = vrot.lane.b32.xlu0 %v1101, 64
    %v1104 = vpop.permute.xlu0 %1103
    %v1106 = vmul.f32 %v1088, %v1104
    %1108 = vrot.lane.b32.xlu0 %v1106, 32
    %v1109 = vpop.permute.xlu0 %1108
    %v1110 = vsel %vm121, %v1109, 0
    %1112 = vmatprep.subr.mxu0 0.0
    %1113 = vmatpush1.msra.mxu0 0.0
    %1114 = vmatprep.subr.mxu0 0.0
    %1115 = vmatpush1.msra.mxu0 0.0
    %1116 = vmatprep.subr.mxu0 0.0
    %1117 = vmatpush1.msra.mxu0 0.0
    %1118 = vmatprep.subr.mxu0 0.0
    %1119 = vmatpush1.msra.mxu0 0.0
    %1120 = vmatprep.subr.mxu0 0.0
    %1121 = vmatpush1.msra.mxu0 0.0
    %1122 = vmatprep.subr.mxu0 0.0
    %1123 = vmatpush1.msra.mxu0 0.0
    %1124 = vmatprep.subr.mxu0 0.0
    %1125 = vmatpush1.msra.mxu0 0.0
    %1126 = vmatprep.subr.mxu0 0.0
    %1127 = vmatpush1.msra.mxu0 0.0
    %1128 = vmatprep.subr.mxu0 0.0
    %1129 = vmatpush1.msra.mxu0 0.0
    %1130 = vmatprep.subr.mxu0 0.0
    %1131 = vmatpush1.msra.mxu0 0.0
    %1132 = vmatprep.subr.mxu0 0.0
    %1133 = vmatpush1.msra.mxu0 0.0
    %1134 = vmatprep.subr.mxu0 0.0
    %1135 = vmatpush1.msra.mxu0 0.0
    %1136 = vmatprep.subr.mxu0 0.0
    %1137 = vmatpush1.msra.mxu0 %v109
    %1138 = vmatprep.subr.mxu0 0.0
    %1139 = vmatpush1.msra.mxu0 %v108
    %1140 = vmatprep.subr.mxu0 0.0
    %1141 = vmatpush1.msra.mxu0 %v107
    %1142 = vmatprep.subr.mxu0 0.0
    %1143 = vmatpush1.msra.mxu0 %v106
    %1144 = vmatprep.subr.mxu0 0.0
    %1145 = vmatpush2.msra.mxu0 0.0
    %1146 = vmatprep.subr.mxu0 0.0
    %1147 = vmatpush2.msra.mxu0 0.0
    %1148 = vmatprep.subr.mxu0 0.0
    %1149 = vmatpush2.msra.mxu0 0.0
    %1150 = vmatprep.subr.mxu0 0.0
    %1151 = vmatpush2.msra.mxu0 0.0
    %1152 = vmatprep.subr.mxu0 0.0
    %1153 = vmatpush2.msra.mxu0 0.0
    %1154 = vmatprep.subr.mxu0 0.0
    %1155 = vmatpush2.msra.mxu0 0.0
    %1156 = vmatprep.subr.mxu0 0.0
    %1157 = vmatpush2.msra.mxu0 0.0
    %1158 = vmatprep.subr.mxu0 0.0
    %1159 = vmatpush2.msra.mxu0 0.0
    %1160 = vmatprep.subr.mxu0 0.0
    %1161 = vmatpush2.msra.mxu0 0.0
    %1162 = vmatprep.subr.mxu0 0.0
    %1163 = vmatpush2.msra.mxu0 0.0
    %1164 = vmatprep.subr.mxu0 0.0
    %1165 = vmatpush2.msra.mxu0 0.0
    %1166 = vmatprep.subr.mxu0 0.0
    %1167 = vmatpush2.msra.mxu0 0.0
    %1168 = vmatprep.subr.mxu0 0.0
    %1169 = vmatpush2.msra.mxu0 0.0
    %1170 = vmatprep.subr.mxu0 0.0
    %1171 = vmatpush2.msra.mxu0 0.0
    %1172 = vmatprep.subr.mxu0 0.0
    %1173 = vmatpush2.msra.mxu0 0.0
    %1174 = vmatprep.subr.mxu0 0.0
    %1175 = vmatpush2.msra.mxu0 0.0
    %1176 = vmatprep.mubr.f32.mxu0 0.0
    %1177 = vmatmul.mubr.f32.gmra.mxu0 %v1110
    %v1178 = vpop.f32.mrf.mxu0
    %v1179 = vadd.f32 %v119, %v1178
    %v1180 = vpop.f32.mrf.mxu0
    %1181 = vdwg.mxu0
    %v1182 = vadd.f32 %v1179, %v1007
    %v1183 = vxor.u32 %v1182, 2147483648
    %v1184 = vmul.f32 %v1183, 1.442695
    %v1185 = vpow.pop %v1184
    %v1186 = vadd.f32 %v1185, 1.0
    %v1187 = vrcp.pop %v1186
    %v1188 = vmul.f32 1.0, %v1187
    %v1189 = vtanh.pop %v1182
    %v1190 = vmul.f32 %v1188, %v928
    %1192 = vrot.lane.b32.xlu0 %v1189, 64
    %v1193 = vpop.permute.xlu0 %1192
    %v1195 = vmul.f32 %v1188, %v1193
    %1197 = vrot.lane.b32.xlu0 %v1195, 32
    %v1198 = vpop.permute.xlu0 %1197
    %v1200 = vadd.f32 %v1190, %v1198
    %v1201 = vtanh.pop %v1200
    %1203 = vrot.lane.b32.xlu0 %v1201, 64
    %v1204 = vpop.permute.xlu0 %1203
    %v1206 = vmul.f32 %v1188, %v1204
    %1208 = vrot.lane.b32.xlu0 %v1206, 32
    %v1209 = vpop.permute.xlu0 %1208
    %v1210 = vsel %vm121, %v1209, 0
    %1212 = vmatprep.subr.mxu0 0.0
    %1213 = vmatpush1.msra.mxu0 0.0
    %1214 = vmatprep.subr.mxu0 0.0
    %1215 = vmatpush1.msra.mxu0 0.0
    %1216 = vmatprep.subr.mxu0 0.0
    %1217 = vmatpush1.msra.mxu0 0.0
    %1218 = vmatprep.subr.mxu0 0.0
    %1219 = vmatpush1.msra.mxu0 0.0
    %1220 = vmatprep.subr.mxu0 0.0
    %1221 = vmatpush1.msra.mxu0 0.0
    %1222 = vmatprep.subr.mxu0 0.0
    %1223 = vmatpush1.msra.mxu0 0.0
    %1224 = vmatprep.subr.mxu0 0.0
    %1225 = vmatpush1.msra.mxu0 0.0
    %1226 = vmatprep.subr.mxu0 0.0
    %1227 = vmatpush1.msra.mxu0 0.0
    %1228 = vmatprep.subr.mxu0 0.0
    %1229 = vmatpush1.msra.mxu0 0.0
    %1230 = vmatprep.subr.mxu0 0.0
    %1231 = vmatpush1.msra.mxu0 0.0
    %1232 = vmatprep.subr.mxu0 0.0
    %1233 = vmatpush1.msra.mxu0 0.0
    %1234 = vmatprep.subr.mxu0 0.0
    %1235 = vmatpush1.msra.mxu0 0.0
    %1236 = vmatprep.subr.mxu0 0.0
    %1237 = vmatpush1.msra.mxu0 %v113
    %1238 = vmatprep.subr.mxu0 0.0
    %1239 = vmatpush1.msra.mxu0 %v112
    %1240 = vmatprep.subr.mxu0 0.0
    %1241 = vmatpush1.msra.mxu0 %v111
    %1242 = vmatprep.subr.mxu0 0.0
    %1243 = vmatpush1.msra.mxu0 %v110
    %1244 = vmatprep.subr.mxu0 0.0
    %1245 = vmatpush2.msra.mxu0 0.0
    %1246 = vmatprep.subr.mxu0 0.0
    %1247 = vmatpush2.msra.mxu0 0.0
    %1248 = vmatprep.subr.mxu0 0.0
    %1249 = vmatpush2.msra.mxu0 0.0
    %1250 = vmatprep.subr.mxu0 0.0
    %1251 = vmatpush2.msra.mxu0 0.0
    %1252 = vmatprep.subr.mxu0 0.0
    %1253 = vmatpush2.msra.mxu0 0.0
    %1254 = vmatprep.subr.mxu0 0.0
    %1255 = vmatpush2.msra.mxu0 0.0
    %1256 = vmatprep.subr.mxu0 0.0
    %1257 = vmatpush2.msra.mxu0 0.0
    %1258 = vmatprep.subr.mxu0 0.0
    %1259 = vmatpush2.msra.mxu0 0.0
    %1260 = vmatprep.subr.mxu0 0.0
    %1261 = vmatpush2.msra.mxu0 0.0
    %1262 = vmatprep.subr.mxu0 0.0
    %1263 = vmatpush2.msra.mxu0 0.0
    %1264 = vmatprep.subr.mxu0 0.0
    %1265 = vmatpush2.msra.mxu0 0.0
    %1266 = vmatprep.subr.mxu0 0.0
    %1267 = vmatpush2.msra.mxu0 0.0
    %1268 = vmatprep.subr.mxu0 0.0
    %1269 = vmatpush2.msra.mxu0 0.0
    %1270 = vmatprep.subr.mxu0 0.0
    %1271 = vmatpush2.msra.mxu0 0.0
    %1272 = vmatprep.subr.mxu0 0.0
    %1273 = vmatpush2.msra.mxu0 0.0
    %1274 = vmatprep.subr.mxu0 0.0
    %1275 = vmatpush2.msra.mxu0 0.0
    %1276 = vmatprep.mubr.f32.mxu0 0.0
    %1277 = vmatmul.mubr.f32.gmra.mxu0 %v1210
    %v1278 = vpop.f32.mrf.mxu0
    %v1279 = vadd.f32 0.0, %v1278
    %v1280 = vpop.f32.mrf.mxu0
    %1281 = vdwg.mxu0
    %s1282 = scalar_lea.vmem [#allocation3], 32
    %v1283 = vld [vmem:[%s1282] sm:$0xff]
    %1284 = vmatprep.subr.mxu0 0.0
    %1285 = vmatpush1.msra.mxu0 0.0
    %1286 = vmatprep.subr.mxu0 0.0
    %1287 = vmatpush1.msra.mxu0 0.0
    %1288 = vmatprep.subr.mxu0 0.0
    %1289 = vmatpush1.msra.mxu0 0.0
    %1290 = vmatprep.subr.mxu0 0.0
    %1291 = vmatpush1.msra.mxu0 0.0
    %1292 = vmatprep.subr.mxu0 0.0
    %1293 = vmatpush1.msra.mxu0 0.0
    %1294 = vmatprep.subr.mxu0 0.0
    %1295 = vmatpush1.msra.mxu0 0.0
    %1296 = vmatprep.subr.mxu0 0.0
    %1297 = vmatpush1.msra.mxu0 0.0
    %1298 = vmatprep.subr.mxu0 0.0
    %1299 = vmatpush1.msra.mxu0 0.0
    %1300 = vmatprep.subr.mxu0 0.0
    %1301 = vmatpush1.msra.mxu0 0.0
    %1302 = vmatprep.subr.mxu0 0.0
    %1303 = vmatpush1.msra.mxu0 0.0
    %1304 = vmatprep.subr.mxu0 0.0
    %1305 = vmatpush1.msra.mxu0 0.0
    %1306 = vmatprep.subr.mxu0 0.0
    %1307 = vmatpush1.msra.mxu0 0.0
    %1308 = vmatprep.subr.mxu0 0.0
    %1309 = vmatpush1.msra.mxu0 %v105
    %1310 = vmatprep.subr.mxu0 0.0
    %1311 = vmatpush1.msra.mxu0 %v104
    %1312 = vmatprep.subr.mxu0 0.0
    %1313 = vmatpush1.msra.mxu0 %v103
    %1314 = vmatprep.subr.mxu0 0.0
    %1315 = vmatpush1.msra.mxu0 %v102
    %1316 = vmatprep.subr.mxu0 0.0
    %1317 = vmatpush2.msra.mxu0 0.0
    %1318 = vmatprep.subr.mxu0 0.0
    %1319 = vmatpush2.msra.mxu0 0.0
    %1320 = vmatprep.subr.mxu0 0.0
    %1321 = vmatpush2.msra.mxu0 0.0
    %1322 = vmatprep.subr.mxu0 0.0
    %1323 = vmatpush2.msra.mxu0 0.0
    %1324 = vmatprep.subr.mxu0 0.0
    %1325 = vmatpush2.msra.mxu0 0.0
    %1326 = vmatprep.subr.mxu0 0.0
    %1327 = vmatpush2.msra.mxu0 0.0
    %1328 = vmatprep.subr.mxu0 0.0
    %1329 = vmatpush2.msra.mxu0 0.0
    %1330 = vmatprep.subr.mxu0 0.0
    %1331 = vmatpush2.msra.mxu0 0.0
    %1332 = vmatprep.subr.mxu0 0.0
    %1333 = vmatpush2.msra.mxu0 0.0
    %1334 = vmatprep.subr.mxu0 0.0
    %1335 = vmatpush2.msra.mxu0 0.0
    %1336 = vmatprep.subr.mxu0 0.0
    %1337 = vmatpush2.msra.mxu0 0.0
    %1338 = vmatprep.subr.mxu0 0.0
    %1339 = vmatpush2.msra.mxu0 0.0
    %1340 = vmatprep.subr.mxu0 0.0
    %1341 = vmatpush2.msra.mxu0 0.0
    %1342 = vmatprep.subr.mxu0 0.0
    %1343 = vmatpush2.msra.mxu0 0.0
    %1344 = vmatprep.subr.mxu0 0.0
    %1345 = vmatpush2.msra.mxu0 0.0
    %1346 = vmatprep.subr.mxu0 0.0
    %1347 = vmatpush2.msra.mxu0 0.0
    %1348 = vmatprep.mubr.f32.mxu0 0.0
    %1349 = vmatmul.mubr.f32.gmra.mxu0 %v1110
    %v1350 = vpop.f32.mrf.mxu0
    %v1351 = vadd.f32 0.0, %v1350
    %v1352 = vpop.f32.mrf.mxu0
    %1353 = vdwg.mxu0
    %v1354 = vadd.f32 %v1283, %v1351
    %v1355 = vxor.u32 %v1354, 2147483648
    %v1356 = vmul.f32 %v1355, 1.442695
    %v1357 = vpow.pop %v1356
    %v1358 = vadd.f32 %v1357, 1.0
    %v1359 = vrcp.pop %v1358
    %v1360 = vmul.f32 1.0, %v1359
    %v1361 = vtanh.pop %v1354
    %v1362 = vmul.f32 %v1360, %v1100
    %1364 = vrot.lane.b32.xlu0 %v1361, 64
    %v1365 = vpop.permute.xlu0 %1364
    %v1367 = vmul.f32 %v1360, %v1365
    %1369 = vrot.lane.b32.xlu0 %v1367, 32
    %v1370 = vpop.permute.xlu0 %1369
    %v1372 = vadd.f32 %v1362, %v1370
    %v1373 = vtanh.pop %v1372
    %1375 = vrot.lane.b32.xlu0 %v1373, 64
    %v1376 = vpop.permute.xlu0 %1375
    %v1378 = vmul.f32 %v1360, %v1376
    %1380 = vrot.lane.b32.xlu0 %v1378, 32
    %v1381 = vpop.permute.xlu0 %1380
    %v1382 = vsel %vm121, %v1381, 0
    %1384 = vmatprep.subr.mxu0 0.0
    %1385 = vmatpush1.msra.mxu0 0.0
    %1386 = vmatprep.subr.mxu0 0.0
    %1387 = vmatpush1.msra.mxu0 0.0
    %1388 = vmatprep.subr.mxu0 0.0
    %1389 = vmatpush1.msra.mxu0 0.0
    %1390 = vmatprep.subr.mxu0 0.0
    %1391 = vmatpush1.msra.mxu0 0.0
    %1392 = vmatprep.subr.mxu0 0.0
    %1393 = vmatpush1.msra.mxu0 0.0
    %1394 = vmatprep.subr.mxu0 0.0
    %1395 = vmatpush1.msra.mxu0 0.0
    %1396 = vmatprep.subr.mxu0 0.0
    %1397 = vmatpush1.msra.mxu0 0.0
    %1398 = vmatprep.subr.mxu0 0.0
    %1399 = vmatpush1.msra.mxu0 0.0
    %1400 = vmatprep.subr.mxu0 0.0
    %1401 = vmatpush1.msra.mxu0 0.0
    %1402 = vmatprep.subr.mxu0 0.0
    %1403 = vmatpush1.msra.mxu0 0.0
    %1404 = vmatprep.subr.mxu0 0.0
    %1405 = vmatpush1.msra.mxu0 0.0
    %1406 = vmatprep.subr.mxu0 0.0
    %1407 = vmatpush1.msra.mxu0 0.0
    %1408 = vmatprep.subr.mxu0 0.0
    %1409 = vmatpush1.msra.mxu0 %v109
    %1410 = vmatprep.subr.mxu0 0.0
    %1411 = vmatpush1.msra.mxu0 %v108
    %1412 = vmatprep.subr.mxu0 0.0
    %1413 = vmatpush1.msra.mxu0 %v107
    %1414 = vmatprep.subr.mxu0 0.0
    %1415 = vmatpush1.msra.mxu0 %v106
    %1416 = vmatprep.subr.mxu0 0.0
    %1417 = vmatpush2.msra.mxu0 0.0
    %1418 = vmatprep.subr.mxu0 0.0
    %1419 = vmatpush2.msra.mxu0 0.0
    %1420 = vmatprep.subr.mxu0 0.0
    %1421 = vmatpush2.msra.mxu0 0.0
    %1422 = vmatprep.subr.mxu0 0.0
    %1423 = vmatpush2.msra.mxu0 0.0
    %1424 = vmatprep.subr.mxu0 0.0
    %1425 = vmatpush2.msra.mxu0 0.0
    %1426 = vmatprep.subr.mxu0 0.0
    %1427 = vmatpush2.msra.mxu0 0.0
    %1428 = vmatprep.subr.mxu0 0.0
    %1429 = vmatpush2.msra.mxu0 0.0
    %1430 = vmatprep.subr.mxu0 0.0
    %1431 = vmatpush2.msra.mxu0 0.0
    %1432 = vmatprep.subr.mxu0 0.0
    %1433 = vmatpush2.msra.mxu0 0.0
    %1434 = vmatprep.subr.mxu0 0.0
    %1435 = vmatpush2.msra.mxu0 0.0
    %1436 = vmatprep.subr.mxu0 0.0
    %1437 = vmatpush2.msra.mxu0 0.0
    %1438 = vmatprep.subr.mxu0 0.0
    %1439 = vmatpush2.msra.mxu0 0.0
    %1440 = vmatprep.subr.mxu0 0.0
    %1441 = vmatpush2.msra.mxu0 0.0
    %1442 = vmatprep.subr.mxu0 0.0
    %1443 = vmatpush2.msra.mxu0 0.0
    %1444 = vmatprep.subr.mxu0 0.0
    %1445 = vmatpush2.msra.mxu0 0.0
    %1446 = vmatprep.subr.mxu0 0.0
    %1447 = vmatpush2.msra.mxu0 0.0
    %1448 = vmatprep.mubr.f32.mxu0 0.0
    %1449 = vmatmul.mubr.f32.gmra.mxu0 %v1382
    %v1450 = vpop.f32.mrf.mxu0
    %v1451 = vadd.f32 %v119, %v1450
    %v1452 = vpop.f32.mrf.mxu0
    %1453 = vdwg.mxu0
    %v1454 = vadd.f32 %v1451, %v1279
    %v1455 = vxor.u32 %v1454, 2147483648
    %v1456 = vmul.f32 %v1455, 1.442695
    %v1457 = vpow.pop %v1456
    %v1458 = vadd.f32 %v1457, 1.0
    %v1459 = vrcp.pop %v1458
    %v1460 = vmul.f32 1.0, %v1459
    %v1461 = vtanh.pop %v1454
    %v1462 = vmul.f32 %v1460, %v1200
    %1464 = vrot.lane.b32.xlu0 %v1461, 64
    %v1465 = vpop.permute.xlu0 %1464
    %v1467 = vmul.f32 %v1460, %v1465
    %1469 = vrot.lane.b32.xlu0 %v1467, 32
    %v1470 = vpop.permute.xlu0 %1469
    %v1472 = vadd.f32 %v1462, %v1470
    %v1473 = vtanh.pop %v1472
    %1475 = vrot.lane.b32.xlu0 %v1473, 64
    %v1476 = vpop.permute.xlu0 %1475
    %v1478 = vmul.f32 %v1460, %v1476
    %1480 = vrot.lane.b32.xlu0 %v1478, 32
    %v1481 = vpop.permute.xlu0 %1480
    %v1482 = vsel %vm121, %v1481, 0
    %1484 = vmatprep.subr.mxu0 0.0
    %1485 = vmatpush1.msra.mxu0 0.0
    %1486 = vmatprep.subr.mxu0 0.0
    %1487 = vmatpush1.msra.mxu0 0.0
    %1488 = vmatprep.subr.mxu0 0.0
    %1489 = vmatpush1.msra.mxu0 0.0
    %1490 = vmatprep.subr.mxu0 0.0
    %1491 = vmatpush1.msra.mxu0 0.0
    %1492 = vmatprep.subr.mxu0 0.0
    %1493 = vmatpush1.msra.mxu0 0.0
    %1494 = vmatprep.subr.mxu0 0.0
    %1495 = vmatpush1.msra.mxu0 0.0
    %1496 = vmatprep.subr.mxu0 0.0
    %1497 = vmatpush1.msra.mxu0 0.0
    %1498 = vmatprep.subr.mxu0 0.0
    %1499 = vmatpush1.msra.mxu0 0.0
    %1500 = vmatprep.subr.mxu0 0.0
    %1501 = vmatpush1.msra.mxu0 0.0
    %1502 = vmatprep.subr.mxu0 0.0
    %1503 = vmatpush1.msra.mxu0 0.0
    %1504 = vmatprep.subr.mxu0 0.0
    %1505 = vmatpush1.msra.mxu0 0.0
    %1506 = vmatprep.subr.mxu0 0.0
    %1507 = vmatpush1.msra.mxu0 0.0
    %1508 = vmatprep.subr.mxu0 0.0
    %1509 = vmatpush1.msra.mxu0 %v113
    %1510 = vmatprep.subr.mxu0 0.0
    %1511 = vmatpush1.msra.mxu0 %v112
    %1512 = vmatprep.subr.mxu0 0.0
    %1513 = vmatpush1.msra.mxu0 %v111
    %1514 = vmatprep.subr.mxu0 0.0
    %1515 = vmatpush1.msra.mxu0 %v110
    %1516 = vmatprep.subr.mxu0 0.0
    %1517 = vmatpush2.msra.mxu0 0.0
    %1518 = vmatprep.subr.mxu0 0.0
    %1519 = vmatpush2.msra.mxu0 0.0
    %1520 = vmatprep.subr.mxu0 0.0
    %1521 = vmatpush2.msra.mxu0 0.0
    %1522 = vmatprep.subr.mxu0 0.0
    %1523 = vmatpush2.msra.mxu0 0.0
    %1524 = vmatprep.subr.mxu0 0.0
    %1525 = vmatpush2.msra.mxu0 0.0
    %1526 = vmatprep.subr.mxu0 0.0
    %1527 = vmatpush2.msra.mxu0 0.0
    %1528 = vmatprep.subr.mxu0 0.0
    %1529 = vmatpush2.msra.mxu0 0.0
    %1530 = vmatprep.subr.mxu0 0.0
    %1531 = vmatpush2.msra.mxu0 0.0
    %1532 = vmatprep.subr.mxu0 0.0
    %1533 = vmatpush2.msra.mxu0 0.0
    %1534 = vmatprep.subr.mxu0 0.0
    %1535 = vmatpush2.msra.mxu0 0.0
    %1536 = vmatprep.subr.mxu0 0.0
    %1537 = vmatpush2.msra.mxu0 0.0
    %1538 = vmatprep.subr.mxu0 0.0
    %1539 = vmatpush2.msra.mxu0 0.0
    %1540 = vmatprep.subr.mxu0 0.0
    %1541 = vmatpush2.msra.mxu0 0.0
    %1542 = vmatprep.subr.mxu0 0.0
    %1543 = vmatpush2.msra.mxu0 0.0
    %1544 = vmatprep.subr.mxu0 0.0
    %1545 = vmatpush2.msra.mxu0 0.0
    %1546 = vmatprep.subr.mxu0 0.0
    %1547 = vmatpush2.msra.mxu0 0.0
    %1548 = vmatprep.mubr.f32.mxu0 0.0
    %1549 = vmatmul.mubr.f32.gmra.mxu0 %v1482
    %v1550 = vpop.f32.mrf.mxu0
    %v1551 = vadd.f32 0.0, %v1550
    %v1552 = vpop.f32.mrf.mxu0
    %1553 = vdwg.mxu0
    %s1554 = scalar_lea.vmem [#allocation3], 40
    %v1555 = vld [vmem:[%s1554] sm:$0xff]
    %1556 = vmatprep.subr.mxu0 0.0
    %1557 = vmatpush1.msra.mxu0 0.0
    %1558 = vmatprep.subr.mxu0 0.0
    %1559 = vmatpush1.msra.mxu0 0.0
    %1560 = vmatprep.subr.mxu0 0.0
    %1561 = vmatpush1.msra.mxu0 0.0
    %1562 = vmatprep.subr.mxu0 0.0
    %1563 = vmatpush1.msra.mxu0 0.0
    %1564 = vmatprep.subr.mxu0 0.0
    %1565 = vmatpush1.msra.mxu0 0.0
    %1566 = vmatprep.subr.mxu0 0.0
    %1567 = vmatpush1.msra.mxu0 0.0
    %1568 = vmatprep.subr.mxu0 0.0
    %1569 = vmatpush1.msra.mxu0 0.0
    %1570 = vmatprep.subr.mxu0 0.0
    %1571 = vmatpush1.msra.mxu0 0.0
    %1572 = vmatprep.subr.mxu0 0.0
    %1573 = vmatpush1.msra.mxu0 0.0
    %1574 = vmatprep.subr.mxu0 0.0
    %1575 = vmatpush1.msra.mxu0 0.0
    %1576 = vmatprep.subr.mxu0 0.0
    %1577 = vmatpush1.msra.mxu0 0.0
    %1578 = vmatprep.subr.mxu0 0.0
    %1579 = vmatpush1.msra.mxu0 0.0
    %1580 = vmatprep.subr.mxu0 0.0
    %1581 = vmatpush1.msra.mxu0 %v105
    %1582 = vmatprep.subr.mxu0 0.0
    %1583 = vmatpush1.msra.mxu0 %v104
    %1584 = vmatprep.subr.mxu0 0.0
    %1585 = vmatpush1.msra.mxu0 %v103
    %1586 = vmatprep.subr.mxu0 0.0
    %1587 = vmatpush1.msra.mxu0 %v102
    %1588 = vmatprep.subr.mxu0 0.0
    %1589 = vmatpush2.msra.mxu0 0.0
    %1590 = vmatprep.subr.mxu0 0.0
    %1591 = vmatpush2.msra.mxu0 0.0
    %1592 = vmatprep.subr.mxu0 0.0
    %1593 = vmatpush2.msra.mxu0 0.0
    %1594 = vmatprep.subr.mxu0 0.0
    %1595 = vmatpush2.msra.mxu0 0.0
    %1596 = vmatprep.subr.mxu0 0.0
    %1597 = vmatpush2.msra.mxu0 0.0
    %1598 = vmatprep.subr.mxu0 0.0
    %1599 = vmatpush2.msra.mxu0 0.0
    %1600 = vmatprep.subr.mxu0 0.0
    %1601 = vmatpush2.msra.mxu0 0.0
    %1602 = vmatprep.subr.mxu0 0.0
    %1603 = vmatpush2.msra.mxu0 0.0
    %1604 = vmatprep.subr.mxu0 0.0
    %1605 = vmatpush2.msra.mxu0 0.0
    %1606 = vmatprep.subr.mxu0 0.0
    %1607 = vmatpush2.msra.mxu0 0.0
    %1608 = vmatprep.subr.mxu0 0.0
    %1609 = vmatpush2.msra.mxu0 0.0
    %1610 = vmatprep.subr.mxu0 0.0
    %1611 = vmatpush2.msra.mxu0 0.0
    %1612 = vmatprep.subr.mxu0 0.0
    %1613 = vmatpush2.msra.mxu0 0.0
    %1614 = vmatprep.subr.mxu0 0.0
    %1615 = vmatpush2.msra.mxu0 0.0
    %1616 = vmatprep.subr.mxu0 0.0
    %1617 = vmatpush2.msra.mxu0 0.0
    %1618 = vmatprep.subr.mxu0 0.0
    %1619 = vmatpush2.msra.mxu0 0.0
    %1620 = vmatprep.mubr.f32.mxu0 0.0
    %1621 = vmatmul.mubr.f32.gmra.mxu0 %v1382
    %v1622 = vpop.f32.mrf.mxu0
    %v1623 = vadd.f32 0.0, %v1622
    %v1624 = vpop.f32.mrf.mxu0
    %1625 = vdwg.mxu0
    %v1626 = vadd.f32 %v1555, %v1623
    %v1627 = vxor.u32 %v1626, 2147483648
    %v1628 = vmul.f32 %v1627, 1.442695
    %v1629 = vpow.pop %v1628
    %v1630 = vadd.f32 %v1629, 1.0
    %v1631 = vrcp.pop %v1630
    %v1632 = vmul.f32 1.0, %v1631
    %v1633 = vtanh.pop %v1626
    %v1634 = vmul.f32 %v1632, %v1372
    %1636 = vrot.lane.b32.xlu0 %v1633, 64
    %v1637 = vpop.permute.xlu0 %1636
    %v1639 = vmul.f32 %v1632, %v1637
    %1641 = vrot.lane.b32.xlu0 %v1639, 32
    %v1642 = vpop.permute.xlu0 %1641
    %v1644 = vadd.f32 %v1634, %v1642
    %v1645 = vtanh.pop %v1644
    %1647 = vrot.lane.b32.xlu0 %v1645, 64
    %v1648 = vpop.permute.xlu0 %1647
    %v1650 = vmul.f32 %v1632, %v1648
    %1652 = vrot.lane.b32.xlu0 %v1650, 32
    %v1653 = vpop.permute.xlu0 %1652
    %v1654 = vsel %vm121, %v1653, 0
    %1656 = vmatprep.subr.mxu0 0.0
    %1657 = vmatpush1.msra.mxu0 0.0
    %1658 = vmatprep.subr.mxu0 0.0
    %1659 = vmatpush1.msra.mxu0 0.0
    %1660 = vmatprep.subr.mxu0 0.0
    %1661 = vmatpush1.msra.mxu0 0.0
    %1662 = vmatprep.subr.mxu0 0.0
    %1663 = vmatpush1.msra.mxu0 0.0
    %1664 = vmatprep.subr.mxu0 0.0
    %1665 = vmatpush1.msra.mxu0 0.0
    %1666 = vmatprep.subr.mxu0 0.0
    %1667 = vmatpush1.msra.mxu0 0.0
    %1668 = vmatprep.subr.mxu0 0.0
    %1669 = vmatpush1.msra.mxu0 0.0
    %1670 = vmatprep.subr.mxu0 0.0
    %1671 = vmatpush1.msra.mxu0 0.0
    %1672 = vmatprep.subr.mxu0 0.0
    %1673 = vmatpush1.msra.mxu0 0.0
    %1674 = vmatprep.subr.mxu0 0.0
    %1675 = vmatpush1.msra.mxu0 0.0
    %1676 = vmatprep.subr.mxu0 0.0
    %1677 = vmatpush1.msra.mxu0 0.0
    %1678 = vmatprep.subr.mxu0 0.0
    %1679 = vmatpush1.msra.mxu0 0.0
    %1680 = vmatprep.subr.mxu0 0.0
    %1681 = vmatpush1.msra.mxu0 %v109
    %1682 = vmatprep.subr.mxu0 0.0
    %1683 = vmatpush1.msra.mxu0 %v108
    %1684 = vmatprep.subr.mxu0 0.0
    %1685 = vmatpush1.msra.mxu0 %v107
    %1686 = vmatprep.subr.mxu0 0.0
    %1687 = vmatpush1.msra.mxu0 %v106
    %1688 = vmatprep.subr.mxu0 0.0
    %1689 = vmatpush2.msra.mxu0 0.0
    %1690 = vmatprep.subr.mxu0 0.0
    %1691 = vmatpush2.msra.mxu0 0.0
    %1692 = vmatprep.subr.mxu0 0.0
    %1693 = vmatpush2.msra.mxu0 0.0
    %1694 = vmatprep.subr.mxu0 0.0
    %1695 = vmatpush2.msra.mxu0 0.0
    %1696 = vmatprep.subr.mxu0 0.0
    %1697 = vmatpush2.msra.mxu0 0.0
    %1698 = vmatprep.subr.mxu0 0.0
    %1699 = vmatpush2.msra.mxu0 0.0
    %1700 = vmatprep.subr.mxu0 0.0
    %1701 = vmatpush2.msra.mxu0 0.0
    %1702 = vmatprep.subr.mxu0 0.0
    %1703 = vmatpush2.msra.mxu0 0.0
    %1704 = vmatprep.subr.mxu0 0.0
    %1705 = vmatpush2.msra.mxu0 0.0
    %1706 = vmatprep.subr.mxu0 0.0
    %1707 = vmatpush2.msra.mxu0 0.0
    %1708 = vmatprep.subr.mxu0 0.0
    %1709 = vmatpush2.msra.mxu0 0.0
    %1710 = vmatprep.subr.mxu0 0.0
    %1711 = vmatpush2.msra.mxu0 0.0
    %1712 = vmatprep.subr.mxu0 0.0
    %1713 = vmatpush2.msra.mxu0 0.0
    %1714 = vmatprep.subr.mxu0 0.0
    %1715 = vmatpush2.msra.mxu0 0.0
    %1716 = vmatprep.subr.mxu0 0.0
    %1717 = vmatpush2.msra.mxu0 0.0
    %1718 = vmatprep.subr.mxu0 0.0
    %1719 = vmatpush2.msra.mxu0 0.0
    %1720 = vmatprep.mubr.f32.mxu0 0.0
    %1721 = vmatmul.mubr.f32.gmra.mxu0 %v1654
    %v1722 = vpop.f32.mrf.mxu0
    %v1723 = vadd.f32 %v119, %v1722
    %v1724 = vpop.f32.mrf.mxu0
    %1725 = vdwg.mxu0
    %v1726 = vadd.f32 %v1723, %v1551
    %v1727 = vxor.u32 %v1726, 2147483648
    %v1728 = vmul.f32 %v1727, 1.442695
    %v1729 = vpow.pop %v1728
    %v1730 = vadd.f32 %v1729, 1.0
    %v1731 = vrcp.pop %v1730
    %v1732 = vmul.f32 1.0, %v1731
    %v1733 = vtanh.pop %v1726
    %v1734 = vmul.f32 %v1732, %v1472
    %1736 = vrot.lane.b32.xlu0 %v1733, 64
    %v1737 = vpop.permute.xlu0 %1736
    %v1739 = vmul.f32 %v1732, %v1737
    %1741 = vrot.lane.b32.xlu0 %v1739, 32
    %v1742 = vpop.permute.xlu0 %1741
    %v1744 = vadd.f32 %v1734, %v1742
    %v1745 = vtanh.pop %v1744
    %1747 = vrot.lane.b32.xlu0 %v1745, 64
    %v1748 = vpop.permute.xlu0 %1747
    %v1750 = vmul.f32 %v1732, %v1748
    %1752 = vrot.lane.b32.xlu0 %v1750, 32
    %v1753 = vpop.permute.xlu0 %1752
    %v1754 = vsel %vm121, %v1753, 0
    %1756 = vmatprep.subr.mxu0 0.0
    %1757 = vmatpush1.msra.mxu0 0.0
    %1758 = vmatprep.subr.mxu0 0.0
    %1759 = vmatpush1.msra.mxu0 0.0
    %1760 = vmatprep.subr.mxu0 0.0
    %1761 = vmatpush1.msra.mxu0 0.0
    %1762 = vmatprep.subr.mxu0 0.0
    %1763 = vmatpush1.msra.mxu0 0.0
    %1764 = vmatprep.subr.mxu0 0.0
    %1765 = vmatpush1.msra.mxu0 0.0
    %1766 = vmatprep.subr.mxu0 0.0
    %1767 = vmatpush1.msra.mxu0 0.0
    %1768 = vmatprep.subr.mxu0 0.0
    %1769 = vmatpush1.msra.mxu0 0.0
    %1770 = vmatprep.subr.mxu0 0.0
    %1771 = vmatpush1.msra.mxu0 0.0
    %1772 = vmatprep.subr.mxu0 0.0
    %1773 = vmatpush1.msra.mxu0 0.0
    %1774 = vmatprep.subr.mxu0 0.0
    %1775 = vmatpush1.msra.mxu0 0.0
    %1776 = vmatprep.subr.mxu0 0.0
    %1777 = vmatpush1.msra.mxu0 0.0
    %1778 = vmatprep.subr.mxu0 0.0
    %1779 = vmatpush1.msra.mxu0 0.0
    %1780 = vmatprep.subr.mxu0 0.0
    %1781 = vmatpush1.msra.mxu0 %v113
    %1782 = vmatprep.subr.mxu0 0.0
    %1783 = vmatpush1.msra.mxu0 %v112
    %1784 = vmatprep.subr.mxu0 0.0
    %1785 = vmatpush1.msra.mxu0 %v111
    %1786 = vmatprep.subr.mxu0 0.0
    %1787 = vmatpush1.msra.mxu0 %v110
    %1788 = vmatprep.subr.mxu0 0.0
    %1789 = vmatpush2.msra.mxu0 0.0
    %1790 = vmatprep.subr.mxu0 0.0
    %1791 = vmatpush2.msra.mxu0 0.0
    %1792 = vmatprep.subr.mxu0 0.0
    %1793 = vmatpush2.msra.mxu0 0.0
    %1794 = vmatprep.subr.mxu0 0.0
    %1795 = vmatpush2.msra.mxu0 0.0
    %1796 = vmatprep.subr.mxu0 0.0
    %1797 = vmatpush2.msra.mxu0 0.0
    %1798 = vmatprep.subr.mxu0 0.0
    %1799 = vmatpush2.msra.mxu0 0.0
    %1800 = vmatprep.subr.mxu0 0.0
    %1801 = vmatpush2.msra.mxu0 0.0
    %1802 = vmatprep.subr.mxu0 0.0
    %1803 = vmatpush2.msra.mxu0 0.0
    %1804 = vmatprep.subr.mxu0 0.0
    %1805 = vmatpush2.msra.mxu0 0.0
    %1806 = vmatprep.subr.mxu0 0.0
    %1807 = vmatpush2.msra.mxu0 0.0
    %1808 = vmatprep.subr.mxu0 0.0
    %1809 = vmatpush2.msra.mxu0 0.0
    %1810 = vmatprep.subr.mxu0 0.0
    %1811 = vmatpush2.msra.mxu0 0.0
    %1812 = vmatprep.subr.mxu0 0.0
    %1813 = vmatpush2.msra.mxu0 0.0
    %1814 = vmatprep.subr.mxu0 0.0
    %1815 = vmatpush2.msra.mxu0 0.0
    %1816 = vmatprep.subr.mxu0 0.0
    %1817 = vmatpush2.msra.mxu0 0.0
    %1818 = vmatprep.subr.mxu0 0.0
    %1819 = vmatpush2.msra.mxu0 0.0
    %1820 = vmatprep.mubr.f32.mxu0 0.0
    %1821 = vmatmul.mubr.f32.gmra.mxu0 %v1754
    %v1822 = vpop.f32.mrf.mxu0
    %v1823 = vadd.f32 0.0, %v1822
    %v1824 = vpop.f32.mrf.mxu0
    %1825 = vdwg.mxu0
    %s1826 = scalar_lea.vmem [#allocation3], 48
    %v1827 = vld [vmem:[%s1826] sm:$0xff]
    %1828 = vmatprep.subr.mxu0 0.0
    %1829 = vmatpush1.msra.mxu0 0.0
    %1830 = vmatprep.subr.mxu0 0.0
    %1831 = vmatpush1.msra.mxu0 0.0
    %1832 = vmatprep.subr.mxu0 0.0
    %1833 = vmatpush1.msra.mxu0 0.0
    %1834 = vmatprep.subr.mxu0 0.0
    %1835 = vmatpush1.msra.mxu0 0.0
    %1836 = vmatprep.subr.mxu0 0.0
    %1837 = vmatpush1.msra.mxu0 0.0
    %1838 = vmatprep.subr.mxu0 0.0
    %1839 = vmatpush1.msra.mxu0 0.0
    %1840 = vmatprep.subr.mxu0 0.0
    %1841 = vmatpush1.msra.mxu0 0.0
    %1842 = vmatprep.subr.mxu0 0.0
    %1843 = vmatpush1.msra.mxu0 0.0
    %1844 = vmatprep.subr.mxu0 0.0
    %1845 = vmatpush1.msra.mxu0 0.0
    %1846 = vmatprep.subr.mxu0 0.0
    %1847 = vmatpush1.msra.mxu0 0.0
    %1848 = vmatprep.subr.mxu0 0.0
    %1849 = vmatpush1.msra.mxu0 0.0
    %1850 = vmatprep.subr.mxu0 0.0
    %1851 = vmatpush1.msra.mxu0 0.0
    %1852 = vmatprep.subr.mxu0 0.0
    %1853 = vmatpush1.msra.mxu0 %v105
    %1854 = vmatprep.subr.mxu0 0.0
    %1855 = vmatpush1.msra.mxu0 %v104
    %1856 = vmatprep.subr.mxu0 0.0
    %1857 = vmatpush1.msra.mxu0 %v103
    %1858 = vmatprep.subr.mxu0 0.0
    %1859 = vmatpush1.msra.mxu0 %v102
    %1860 = vmatprep.subr.mxu0 0.0
    %1861 = vmatpush2.msra.mxu0 0.0
    %1862 = vmatprep.subr.mxu0 0.0
    %1863 = vmatpush2.msra.mxu0 0.0
    %1864 = vmatprep.subr.mxu0 0.0
    %1865 = vmatpush2.msra.mxu0 0.0
    %1866 = vmatprep.subr.mxu0 0.0
    %1867 = vmatpush2.msra.mxu0 0.0
    %1868 = vmatprep.subr.mxu0 0.0
    %1869 = vmatpush2.msra.mxu0 0.0
    %1870 = vmatprep.subr.mxu0 0.0
    %1871 = vmatpush2.msra.mxu0 0.0
    %1872 = vmatprep.subr.mxu0 0.0
    %1873 = vmatpush2.msra.mxu0 0.0
    %1874 = vmatprep.subr.mxu0 0.0
    %1875 = vmatpush2.msra.mxu0 0.0
    %1876 = vmatprep.subr.mxu0 0.0
    %1877 = vmatpush2.msra.mxu0 0.0
    %1878 = vmatprep.subr.mxu0 0.0
    %1879 = vmatpush2.msra.mxu0 0.0
    %1880 = vmatprep.subr.mxu0 0.0
    %1881 = vmatpush2.msra.mxu0 0.0
    %1882 = vmatprep.subr.mxu0 0.0
    %1883 = vmatpush2.msra.mxu0 0.0
    %1884 = vmatprep.subr.mxu0 0.0
    %1885 = vmatpush2.msra.mxu0 0.0
    %1886 = vmatprep.subr.mxu0 0.0
    %1887 = vmatpush2.msra.mxu0 0.0
    %1888 = vmatprep.subr.mxu0 0.0
    %1889 = vmatpush2.msra.mxu0 0.0
    %1890 = vmatprep.subr.mxu0 0.0
    %1891 = vmatpush2.msra.mxu0 0.0
    %1892 = vmatprep.mubr.f32.mxu0 0.0
    %1893 = vmatmul.mubr.f32.gmra.mxu0 %v1654
    %v1894 = vpop.f32.mrf.mxu0
    %v1895 = vadd.f32 0.0, %v1894
    %v1896 = vpop.f32.mrf.mxu0
    %1897 = vdwg.mxu0
    %v1898 = vadd.f32 %v1827, %v1895
    %v1899 = vxor.u32 %v1898, 2147483648
    %v1900 = vmul.f32 %v1899, 1.442695
    %v1901 = vpow.pop %v1900
    %v1902 = vadd.f32 %v1901, 1.0
    %v1903 = vrcp.pop %v1902
    %v1904 = vmul.f32 1.0, %v1903
    %v1905 = vtanh.pop %v1898
    %v1906 = vmul.f32 %v1904, %v1644
    %1908 = vrot.lane.b32.xlu0 %v1905, 64
    %v1909 = vpop.permute.xlu0 %1908
    %v1911 = vmul.f32 %v1904, %v1909
    %1913 = vrot.lane.b32.xlu0 %v1911, 32
    %v1914 = vpop.permute.xlu0 %1913
    %v1916 = vadd.f32 %v1906, %v1914
    %v1917 = vtanh.pop %v1916
    %1919 = vrot.lane.b32.xlu0 %v1917, 64
    %v1920 = vpop.permute.xlu0 %1919
    %v1922 = vmul.f32 %v1904, %v1920
    %1924 = vrot.lane.b32.xlu0 %v1922, 32
    %v1925 = vpop.permute.xlu0 %1924
    %v1926 = vsel %vm121, %v1925, 0
    %1928 = vmatprep.subr.mxu0 0.0
    %1929 = vmatpush1.msra.mxu0 0.0
    %1930 = vmatprep.subr.mxu0 0.0
    %1931 = vmatpush1.msra.mxu0 0.0
    %1932 = vmatprep.subr.mxu0 0.0
    %1933 = vmatpush1.msra.mxu0 0.0
    %1934 = vmatprep.subr.mxu0 0.0
    %1935 = vmatpush1.msra.mxu0 0.0
    %1936 = vmatprep.subr.mxu0 0.0
    %1937 = vmatpush1.msra.mxu0 0.0
    %1938 = vmatprep.subr.mxu0 0.0
    %1939 = vmatpush1.msra.mxu0 0.0
    %1940 = vmatprep.subr.mxu0 0.0
    %1941 = vmatpush1.msra.mxu0 0.0
    %1942 = vmatprep.subr.mxu0 0.0
    %1943 = vmatpush1.msra.mxu0 0.0
    %1944 = vmatprep.subr.mxu0 0.0
    %1945 = vmatpush1.msra.mxu0 0.0
    %1946 = vmatprep.subr.mxu0 0.0
    %1947 = vmatpush1.msra.mxu0 0.0
    %1948 = vmatprep.subr.mxu0 0.0
    %1949 = vmatpush1.msra.mxu0 0.0
    %1950 = vmatprep.subr.mxu0 0.0
    %1951 = vmatpush1.msra.mxu0 0.0
    %1952 = vmatprep.subr.mxu0 0.0
    %1953 = vmatpush1.msra.mxu0 %v109
    %1954 = vmatprep.subr.mxu0 0.0
    %1955 = vmatpush1.msra.mxu0 %v108
    %1956 = vmatprep.subr.mxu0 0.0
    %1957 = vmatpush1.msra.mxu0 %v107
    %1958 = vmatprep.subr.mxu0 0.0
    %1959 = vmatpush1.msra.mxu0 %v106
    %1960 = vmatprep.subr.mxu0 0.0
    %1961 = vmatpush2.msra.mxu0 0.0
    %1962 = vmatprep.subr.mxu0 0.0
    %1963 = vmatpush2.msra.mxu0 0.0
    %1964 = vmatprep.subr.mxu0 0.0
    %1965 = vmatpush2.msra.mxu0 0.0
    %1966 = vmatprep.subr.mxu0 0.0
    %1967 = vmatpush2.msra.mxu0 0.0
    %1968 = vmatprep.subr.mxu0 0.0
    %1969 = vmatpush2.msra.mxu0 0.0
    %1970 = vmatprep.subr.mxu0 0.0
    %1971 = vmatpush2.msra.mxu0 0.0
    %1972 = vmatprep.subr.mxu0 0.0
    %1973 = vmatpush2.msra.mxu0 0.0
    %1974 = vmatprep.subr.mxu0 0.0
    %1975 = vmatpush2.msra.mxu0 0.0
    %1976 = vmatprep.subr.mxu0 0.0
    %1977 = vmatpush2.msra.mxu0 0.0
    %1978 = vmatprep.subr.mxu0 0.0
    %1979 = vmatpush2.msra.mxu0 0.0
    %1980 = vmatprep.subr.mxu0 0.0
    %1981 = vmatpush2.msra.mxu0 0.0
    %1982 = vmatprep.subr.mxu0 0.0
    %1983 = vmatpush2.msra.mxu0 0.0
    %1984 = vmatprep.subr.mxu0 0.0
    %1985 = vmatpush2.msra.mxu0 0.0
    %1986 = vmatprep.subr.mxu0 0.0
    %1987 = vmatpush2.msra.mxu0 0.0
    %1988 = vmatprep.subr.mxu0 0.0
    %1989 = vmatpush2.msra.mxu0 0.0
    %1990 = vmatprep.subr.mxu0 0.0
    %1991 = vmatpush2.msra.mxu0 0.0
    %1992 = vmatprep.mubr.f32.mxu0 0.0
    %1993 = vmatmul.mubr.f32.gmra.mxu0 %v1926
    %v1994 = vpop.f32.mrf.mxu0
    %v1995 = vadd.f32 %v119, %v1994
    %v1996 = vpop.f32.mrf.mxu0
    %1997 = vdwg.mxu0
    %v1998 = vadd.f32 %v1995, %v1823
    %v1999 = vxor.u32 %v1998, 2147483648
    %v2000 = vmul.f32 %v1999, 1.442695
    %v2001 = vpow.pop %v2000
    %v2002 = vadd.f32 %v2001, 1.0
    %v2003 = vrcp.pop %v2002
    %v2004 = vmul.f32 1.0, %v2003
    %v2005 = vtanh.pop %v1998
    %v2006 = vmul.f32 %v2004, %v1744
    %2008 = vrot.lane.b32.xlu0 %v2005, 64
    %v2009 = vpop.permute.xlu0 %2008
    %v2011 = vmul.f32 %v2004, %v2009
    %2013 = vrot.lane.b32.xlu0 %v2011, 32
    %v2014 = vpop.permute.xlu0 %2013
    %v2016 = vadd.f32 %v2006, %v2014
    %v2017 = vtanh.pop %v2016
    %2019 = vrot.lane.b32.xlu0 %v2017, 64
    %v2020 = vpop.permute.xlu0 %2019
    %v2022 = vmul.f32 %v2004, %v2020
    %2024 = vrot.lane.b32.xlu0 %v2022, 32
    %v2025 = vpop.permute.xlu0 %2024
    %v2026 = vsel %vm121, %v2025, 0
    %2028 = vmatprep.subr.mxu0 0.0
    %2029 = vmatpush1.msra.mxu0 0.0
    %2030 = vmatprep.subr.mxu0 0.0
    %2031 = vmatpush1.msra.mxu0 0.0
    %2032 = vmatprep.subr.mxu0 0.0
    %2033 = vmatpush1.msra.mxu0 0.0
    %2034 = vmatprep.subr.mxu0 0.0
    %2035 = vmatpush1.msra.mxu0 0.0
    %2036 = vmatprep.subr.mxu0 0.0
    %2037 = vmatpush1.msra.mxu0 0.0
    %2038 = vmatprep.subr.mxu0 0.0
    %2039 = vmatpush1.msra.mxu0 0.0
    %2040 = vmatprep.subr.mxu0 0.0
    %2041 = vmatpush1.msra.mxu0 0.0
    %2042 = vmatprep.subr.mxu0 0.0
    %2043 = vmatpush1.msra.mxu0 0.0
    %2044 = vmatprep.subr.mxu0 0.0
    %2045 = vmatpush1.msra.mxu0 0.0
    %2046 = vmatprep.subr.mxu0 0.0
    %2047 = vmatpush1.msra.mxu0 0.0
    %2048 = vmatprep.subr.mxu0 0.0
    %2049 = vmatpush1.msra.mxu0 0.0
    %2050 = vmatprep.subr.mxu0 0.0
    %2051 = vmatpush1.msra.mxu0 0.0
    %2052 = vmatprep.subr.mxu0 0.0
    %2053 = vmatpush1.msra.mxu0 %v113
    %2054 = vmatprep.subr.mxu0 0.0
    %2055 = vmatpush1.msra.mxu0 %v112
    %2056 = vmatprep.subr.mxu0 0.0
    %2057 = vmatpush1.msra.mxu0 %v111
    %2058 = vmatprep.subr.mxu0 0.0
    %2059 = vmatpush1.msra.mxu0 %v110
    %2060 = vmatprep.subr.mxu0 0.0
    %2061 = vmatpush2.msra.mxu0 0.0
    %2062 = vmatprep.subr.mxu0 0.0
    %2063 = vmatpush2.msra.mxu0 0.0
    %2064 = vmatprep.subr.mxu0 0.0
    %2065 = vmatpush2.msra.mxu0 0.0
    %2066 = vmatprep.subr.mxu0 0.0
    %2067 = vmatpush2.msra.mxu0 0.0
    %2068 = vmatprep.subr.mxu0 0.0
    %2069 = vmatpush2.msra.mxu0 0.0
    %2070 = vmatprep.subr.mxu0 0.0
    %2071 = vmatpush2.msra.mxu0 0.0
    %2072 = vmatprep.subr.mxu0 0.0
    %2073 = vmatpush2.msra.mxu0 0.0
    %2074 = vmatprep.subr.mxu0 0.0
    %2075 = vmatpush2.msra.mxu0 0.0
    %2076 = vmatprep.subr.mxu0 0.0
    %2077 = vmatpush2.msra.mxu0 0.0
    %2078 = vmatprep.subr.mxu0 0.0
    %2079 = vmatpush2.msra.mxu0 0.0
    %2080 = vmatprep.subr.mxu0 0.0
    %2081 = vmatpush2.msra.mxu0 0.0
    %2082 = vmatprep.subr.mxu0 0.0
    %2083 = vmatpush2.msra.mxu0 0.0
    %2084 = vmatprep.subr.mxu0 0.0
    %2085 = vmatpush2.msra.mxu0 0.0
    %2086 = vmatprep.subr.mxu0 0.0
    %2087 = vmatpush2.msra.mxu0 0.0
    %2088 = vmatprep.subr.mxu0 0.0
    %2089 = vmatpush2.msra.mxu0 0.0
    %2090 = vmatprep.subr.mxu0 0.0
    %2091 = vmatpush2.msra.mxu0 0.0
    %2092 = vmatprep.mubr.f32.mxu0 0.0
    %2093 = vmatmul.mubr.f32.gmra.mxu0 %v2026
    %v2094 = vpop.f32.mrf.mxu0
    %v2095 = vadd.f32 0.0, %v2094
    %v2096 = vpop.f32.mrf.mxu0
    %2097 = vdwg.mxu0
    %s2098 = scalar_lea.vmem [#allocation3], 56
    %v2099 = vld [vmem:[%s2098] sm:$0xff]
    %2100 = vmatprep.subr.mxu0 0.0
    %2101 = vmatpush1.msra.mxu0 0.0
    %2102 = vmatprep.subr.mxu0 0.0
    %2103 = vmatpush1.msra.mxu0 0.0
    %2104 = vmatprep.subr.mxu0 0.0
    %2105 = vmatpush1.msra.mxu0 0.0
    %2106 = vmatprep.subr.mxu0 0.0
    %2107 = vmatpush1.msra.mxu0 0.0
    %2108 = vmatprep.subr.mxu0 0.0
    %2109 = vmatpush1.msra.mxu0 0.0
    %2110 = vmatprep.subr.mxu0 0.0
    %2111 = vmatpush1.msra.mxu0 0.0
    %2112 = vmatprep.subr.mxu0 0.0
    %2113 = vmatpush1.msra.mxu0 0.0
    %2114 = vmatprep.subr.mxu0 0.0
    %2115 = vmatpush1.msra.mxu0 0.0
    %2116 = vmatprep.subr.mxu0 0.0
    %2117 = vmatpush1.msra.mxu0 0.0
    %2118 = vmatprep.subr.mxu0 0.0
    %2119 = vmatpush1.msra.mxu0 0.0
    %2120 = vmatprep.subr.mxu0 0.0
    %2121 = vmatpush1.msra.mxu0 0.0
    %2122 = vmatprep.subr.mxu0 0.0
    %2123 = vmatpush1.msra.mxu0 0.0
    %2124 = vmatprep.subr.mxu0 0.0
    %2125 = vmatpush1.msra.mxu0 %v105
    %2126 = vmatprep.subr.mxu0 0.0
    %2127 = vmatpush1.msra.mxu0 %v104
    %2128 = vmatprep.subr.mxu0 0.0
    %2129 = vmatpush1.msra.mxu0 %v103
    %2130 = vmatprep.subr.mxu0 0.0
    %2131 = vmatpush1.msra.mxu0 %v102
    %2132 = vmatprep.subr.mxu0 0.0
    %2133 = vmatpush2.msra.mxu0 0.0
    %2134 = vmatprep.subr.mxu0 0.0
    %2135 = vmatpush2.msra.mxu0 0.0
    %2136 = vmatprep.subr.mxu0 0.0
    %2137 = vmatpush2.msra.mxu0 0.0
    %2138 = vmatprep.subr.mxu0 0.0
    %2139 = vmatpush2.msra.mxu0 0.0
    %2140 = vmatprep.subr.mxu0 0.0
    %2141 = vmatpush2.msra.mxu0 0.0
    %2142 = vmatprep.subr.mxu0 0.0
    %2143 = vmatpush2.msra.mxu0 0.0
    %2144 = vmatprep.subr.mxu0 0.0
    %2145 = vmatpush2.msra.mxu0 0.0
    %2146 = vmatprep.subr.mxu0 0.0
    %2147 = vmatpush2.msra.mxu0 0.0
    %2148 = vmatprep.subr.mxu0 0.0
    %2149 = vmatpush2.msra.mxu0 0.0
    %2150 = vmatprep.subr.mxu0 0.0
    %2151 = vmatpush2.msra.mxu0 0.0
    %2152 = vmatprep.subr.mxu0 0.0
    %2153 = vmatpush2.msra.mxu0 0.0
    %2154 = vmatprep.subr.mxu0 0.0
    %2155 = vmatpush2.msra.mxu0 0.0
    %2156 = vmatprep.subr.mxu0 0.0
    %2157 = vmatpush2.msra.mxu0 0.0
    %2158 = vmatprep.subr.mxu0 0.0
    %2159 = vmatpush2.msra.mxu0 0.0
    %2160 = vmatprep.subr.mxu0 0.0
    %2161 = vmatpush2.msra.mxu0 0.0
    %2162 = vmatprep.subr.mxu0 0.0
    %2163 = vmatpush2.msra.mxu0 0.0
    %2164 = vmatprep.mubr.f32.mxu0 0.0
    %2165 = vmatmul.mubr.f32.gmra.mxu0 %v1926
    %v2166 = vpop.f32.mrf.mxu0
    %v2167 = vadd.f32 0.0, %v2166
    %v2168 = vpop.f32.mrf.mxu0
    %2169 = vdwg.mxu0
    %v2170 = vadd.f32 %v2099, %v2167
    %v2171 = vxor.u32 %v2170, 2147483648
    %v2172 = vmul.f32 %v2171, 1.442695
    %v2173 = vpow.pop %v2172
    %v2174 = vadd.f32 %v2173, 1.0
    %v2175 = vrcp.pop %v2174
    %v2176 = vmul.f32 1.0, %v2175
    %v2177 = vtanh.pop %v2170
    %v2178 = vmul.f32 %v2176, %v1916
    %2180 = vrot.lane.b32.xlu0 %v2177, 64
    %v2181 = vpop.permute.xlu0 %2180
    %v2183 = vmul.f32 %v2176, %v2181
    %2185 = vrot.lane.b32.xlu0 %v2183, 32
    %v2186 = vpop.permute.xlu0 %2185
    %v2188 = vadd.f32 %v2178, %v2186
    %v2189 = vtanh.pop %v2188
    %2191 = vrot.lane.b32.xlu0 %v2189, 64
    %v2192 = vpop.permute.xlu0 %2191
    %v2194 = vmul.f32 %v2176, %v2192
    %2196 = vrot.lane.b32.xlu0 %v2194, 32
    %v2197 = vpop.permute.xlu0 %2196
    %v2198 = vsel %vm121, %v2197, 0
    %2200 = vmatprep.subr.mxu0 0.0
    %2201 = vmatpush1.msra.mxu0 0.0
    %2202 = vmatprep.subr.mxu0 0.0
    %2203 = vmatpush1.msra.mxu0 0.0
    %2204 = vmatprep.subr.mxu0 0.0
    %2205 = vmatpush1.msra.mxu0 0.0
    %2206 = vmatprep.subr.mxu0 0.0
    %2207 = vmatpush1.msra.mxu0 0.0
    %2208 = vmatprep.subr.mxu0 0.0
    %2209 = vmatpush1.msra.mxu0 0.0
    %2210 = vmatprep.subr.mxu0 0.0
    %2211 = vmatpush1.msra.mxu0 0.0
    %2212 = vmatprep.subr.mxu0 0.0
    %2213 = vmatpush1.msra.mxu0 0.0
    %2214 = vmatprep.subr.mxu0 0.0
    %2215 = vmatpush1.msra.mxu0 0.0
    %2216 = vmatprep.subr.mxu0 0.0
    %2217 = vmatpush1.msra.mxu0 0.0
    %2218 = vmatprep.subr.mxu0 0.0
    %2219 = vmatpush1.msra.mxu0 0.0
    %2220 = vmatprep.subr.mxu0 0.0
    %2221 = vmatpush1.msra.mxu0 0.0
    %2222 = vmatprep.subr.mxu0 0.0
    %2223 = vmatpush1.msra.mxu0 0.0
    %2224 = vmatprep.subr.mxu0 0.0
    %2225 = vmatpush1.msra.mxu0 %v109
    %2226 = vmatprep.subr.mxu0 0.0
    %2227 = vmatpush1.msra.mxu0 %v108
    %2228 = vmatprep.subr.mxu0 0.0
    %2229 = vmatpush1.msra.mxu0 %v107
    %2230 = vmatprep.subr.mxu0 0.0
    %2231 = vmatpush1.msra.mxu0 %v106
    %2232 = vmatprep.subr.mxu0 0.0
    %2233 = vmatpush2.msra.mxu0 0.0
    %2234 = vmatprep.subr.mxu0 0.0
    %2235 = vmatpush2.msra.mxu0 0.0
    %2236 = vmatprep.subr.mxu0 0.0
    %2237 = vmatpush2.msra.mxu0 0.0
    %2238 = vmatprep.subr.mxu0 0.0
    %2239 = vmatpush2.msra.mxu0 0.0
    %2240 = vmatprep.subr.mxu0 0.0
    %2241 = vmatpush2.msra.mxu0 0.0
    %2242 = vmatprep.subr.mxu0 0.0
    %2243 = vmatpush2.msra.mxu0 0.0
    %2244 = vmatprep.subr.mxu0 0.0
    %2245 = vmatpush2.msra.mxu0 0.0
    %2246 = vmatprep.subr.mxu0 0.0
    %2247 = vmatpush2.msra.mxu0 0.0
    %2248 = vmatprep.subr.mxu0 0.0
    %2249 = vmatpush2.msra.mxu0 0.0
    %2250 = vmatprep.subr.mxu0 0.0
    %2251 = vmatpush2.msra.mxu0 0.0
    %2252 = vmatprep.subr.mxu0 0.0
    %2253 = vmatpush2.msra.mxu0 0.0
    %2254 = vmatprep.subr.mxu0 0.0
    %2255 = vmatpush2.msra.mxu0 0.0
    %2256 = vmatprep.subr.mxu0 0.0
    %2257 = vmatpush2.msra.mxu0 0.0
    %2258 = vmatprep.subr.mxu0 0.0
    %2259 = vmatpush2.msra.mxu0 0.0
    %2260 = vmatprep.subr.mxu0 0.0
    %2261 = vmatpush2.msra.mxu0 0.0
    %2262 = vmatprep.subr.mxu0 0.0
    %2263 = vmatpush2.msra.mxu0 0.0
    %2264 = vmatprep.mubr.f32.mxu0 0.0
    %2265 = vmatmul.mubr.f32.gmra.mxu0 %v2198
    %v2266 = vpop.f32.mrf.mxu0
    %v2267 = vadd.f32 %v119, %v2266
    %v2268 = vpop.f32.mrf.mxu0
    %2269 = vdwg.mxu0
    %v2270 = vadd.f32 %v2267, %v2095
    %v2271 = vxor.u32 %v2270, 2147483648
    %v2272 = vmul.f32 %v2271, 1.442695
    %v2273 = vpow.pop %v2272
    %v2274 = vadd.f32 %v2273, 1.0
    %v2275 = vrcp.pop %v2274
    %v2276 = vmul.f32 1.0, %v2275
    %v2277 = vtanh.pop %v2270
    %v2278 = vmul.f32 %v2276, %v2016
    %2280 = vrot.lane.b32.xlu0 %v2277, 64
    %v2281 = vpop.permute.xlu0 %2280
    %v2283 = vmul.f32 %v2276, %v2281
    %2285 = vrot.lane.b32.xlu0 %v2283, 32
    %v2286 = vpop.permute.xlu0 %2285
    %v2288 = vadd.f32 %v2278, %v2286
    %v2289 = vtanh.pop %v2288
    %2291 = vrot.lane.b32.xlu0 %v2289, 64
    %v2292 = vpop.permute.xlu0 %2291
    %v2294 = vmul.f32 %v2276, %v2292
    %v2295 = vld [vmem:[#allocation10] sm:$0xff]
    %v2296 = vld [vmem:[#allocation10 + $0x8] sm:$0xff]
    %v2297 = vld [vmem:[#allocation10 + $0x10] sm:$0xff]
    %v2298 = vld [vmem:[#allocation10 + $0x18] sm:$0xff]
    %v2299 = vld [vmem:[%s6] sm:$0x1]
    %v2301 = vlaneseq
    %v2302 = vshrl.u32 %v2301, 7
    %v2303 = vsub.s32 0, %v2302
    %v2304 = vrot.slane %v2299, %v2303
    %2307 = vrot.lane.b32.xlu0 %v2294, 32
    %v2308 = vpop.permute.xlu0 %2307
    %v2309 = vsel %vm121, %v2308, 0
    %2311 = vmatprep.subr.mxu0 0.0
    %2312 = vmatpush1.msra.mxu0 0.0
    %2313 = vmatprep.subr.mxu0 0.0
    %2314 = vmatpush1.msra.mxu0 0.0
    %2315 = vmatprep.subr.mxu0 0.0
    %2316 = vmatpush1.msra.mxu0 0.0
    %2317 = vmatprep.subr.mxu0 0.0
    %2318 = vmatpush1.msra.mxu0 0.0
    %2319 = vmatprep.subr.mxu0 0.0
    %2320 = vmatpush1.msra.mxu0 0.0
    %2321 = vmatprep.subr.mxu0 0.0
    %2322 = vmatpush1.msra.mxu0 0.0
    %2323 = vmatprep.subr.mxu0 0.0
    %2324 = vmatpush1.msra.mxu0 0.0
    %2325 = vmatprep.subr.mxu0 0.0
    %2326 = vmatpush1.msra.mxu0 0.0
    %2327 = vmatprep.subr.mxu0 0.0
    %2328 = vmatpush1.msra.mxu0 0.0
    %2329 = vmatprep.subr.mxu0 0.0
    %2330 = vmatpush1.msra.mxu0 0.0
    %2331 = vmatprep.subr.mxu0 0.0
    %2332 = vmatpush1.msra.mxu0 0.0
    %2333 = vmatprep.subr.mxu0 0.0
    %2334 = vmatpush1.msra.mxu0 0.0
    %2335 = vmatprep.subr.mxu0 0.0
    %2336 = vmatpush1.msra.mxu0 %v2298
    %2337 = vmatprep.subr.mxu0 0.0
    %2338 = vmatpush1.msra.mxu0 %v2297
    %2339 = vmatprep.subr.mxu0 0.0
    %2340 = vmatpush1.msra.mxu0 %v2296
    %2341 = vmatprep.subr.mxu0 0.0
    %2342 = vmatpush1.msra.mxu0 %v2295
    %2343 = vmatprep.subr.mxu0 0.0
    %2344 = vmatpush2.msra.mxu0 0.0
    %2345 = vmatprep.subr.mxu0 0.0
    %2346 = vmatpush2.msra.mxu0 0.0
    %2347 = vmatprep.subr.mxu0 0.0
    %2348 = vmatpush2.msra.mxu0 0.0
    %2349 = vmatprep.subr.mxu0 0.0
    %2350 = vmatpush2.msra.mxu0 0.0
    %2351 = vmatprep.subr.mxu0 0.0
    %2352 = vmatpush2.msra.mxu0 0.0
    %2353 = vmatprep.subr.mxu0 0.0
    %2354 = vmatpush2.msra.mxu0 0.0
    %2355 = vmatprep.subr.mxu0 0.0
    %2356 = vmatpush2.msra.mxu0 0.0
    %2357 = vmatprep.subr.mxu0 0.0
    %2358 = vmatpush2.msra.mxu0 0.0
    %2359 = vmatprep.subr.mxu0 0.0
    %2360 = vmatpush2.msra.mxu0 0.0
    %2361 = vmatprep.subr.mxu0 0.0
    %2362 = vmatpush2.msra.mxu0 0.0
    %2363 = vmatprep.subr.mxu0 0.0
    %2364 = vmatpush2.msra.mxu0 0.0
    %2365 = vmatprep.subr.mxu0 0.0
    %2366 = vmatpush2.msra.mxu0 0.0
    %2367 = vmatprep.subr.mxu0 0.0
    %2368 = vmatpush2.msra.mxu0 0.0
    %2369 = vmatprep.subr.mxu0 0.0
    %2370 = vmatpush2.msra.mxu0 0.0
    %2371 = vmatprep.subr.mxu0 0.0
    %2372 = vmatpush2.msra.mxu0 0.0
    %2373 = vmatprep.subr.mxu0 0.0
    %2374 = vmatpush2.msra.mxu0 0.0
    %2375 = vmatprep.mubr.f32.mxu0 0.0
    %2376 = vmatmul.mubr.f32.gmra.mxu0 %v2309
    %v2377 = vpop.f32.mrf.mxu0
    %v2378 = vadd.f32 %v2304, %v2377
    %v2379 = vpop.f32.mrf.mxu0
    %2380 = vdwg.mxu0
    %v2381 = vmax.f32 %v2378, 0.0
    %v2382 = vld [vmem:[%s7] sm:$0x1]
    %v2384 = vlaneseq
    %v2385 = vshrl.u32 %v2384, 7
    %v2386 = vsub.s32 0, %v2385
    %v2387 = vrot.slane %v2382, %v2386
    %v2389 = vmul.f32 %v2381, %v2387
    %vm2390 = vcmask 523264
    %v2391 = vsel %vm2390, %v2389, 0.0
    %2392 = vadd.xlane.f32.xlu0 %v2391
    %v2393 = vpop.xlane.xlu0 %2392
    %v2394 = vld [vmem:[#allocation2] sm:$0x1]
    %v2396 = vlaneseq
    %v2397 = vshrl.u32 %v2396, 7
    %v2398 = vsub.s32 0, %v2397
    %v2399 = vrot.slane %v2394, %v2398
    %v2401 = vadd.f32 %v2393, %v2399
    %v2402 = vxor.u32 %v2401, 2147483648
    %v2403 = vmul.f32 %v2402, 1.442695
    %v2404 = vpow.pop %v2403
    %v2405 = vadd.f32 %v2404, 1.0
    %v2406 = vrcp.pop %v2405
    %v2407 = vmul.f32 1.0, %v2406
    %vm2408 = vcmask 7168
    %2409 = vst.msk [vmem:[%s9] sm:$0xff] %vm2408, %v2407
    // Predicated region
    $region58: #{tpu_custom_call.1} parent=1 // pred_check
      _
    $region59: #{tpu_custom_call.1} parent=1 // pred_check_branch
      %2411 = sbr.rel (0) target = $region61
    $region60: #{tpu_custom_call.1} parent=1 // pred_region
      _
    $region61: #{tpu_custom_call.1} parent=1 // pred_fallthru
      _
    // Predicated region
    $region62: #{tpu_custom_call.1} parent=1 // pred_check
      _
    $region63: #{tpu_custom_call.1} parent=1 // pred_check_branch
      %2413 = sbr.rel (0) target = $region65
    $region64: #{tpu_custom_call.1} parent=1 // pred_region
      _
    $region65: #{tpu_custom_call.1} parent=1 // pred_fallthru
      _
    %2414 = vsyncpa [#allocation4], 1
    %2415 = vsyncpa [#allocation6], 1
    %2416 = vsyncpa [#allocation9], 1

</llo_original>
